<compile_context>
chip_gen: v7x
topology: tpu7x:2x2x1
jax: 0.10.0
libtpu: 0.0.40
codegen_flags: <defaults>
</compile_context>

<pallas_src>
import functools

import numpy as np
import jax
import jax.numpy as jnp
from jax import lax
from jax.experimental import pallas as pl
from jax.experimental.pallas import tpu as pltpu

CONTEXT = 6
DIM = 32
TOKENS = ['END'] + [str(i) for i in range(10)] + ['+', '*', '=']
NTOK = len(TOKENS)
LN_EPS = 1e-5        # torch.nn.LayerNorm default
LOGIT_PAD = 128      # lane-dense logits slab width (>= NTOK)


# ---------------------------------------------------------------------------
# In-kernel helpers
# ---------------------------------------------------------------------------
def _mm_t(a, w):
  """nn.Linear semantics: a:(M,K), w:(N,K) -> a @ w.T : (M,N).

  Operands fed to the MXU in bf16, f32 accumulation."""
  return lax.dot_general(a.astype(jnp.bfloat16), w.astype(jnp.bfloat16),
                         (((1,), (1,)), ((), ())),
                         preferred_element_type=jnp.float32)


def _mm(a, b):
  """a:(M,K) @ b:(K,N) with bf16 MXU operands, f32 accumulation."""
  return jnp.dot(a.astype(jnp.bfloat16), b.astype(jnp.bfloat16),
                 preferred_element_type=jnp.float32)


def _layernorm(x, g, b):
  """LayerNorm over last axis (biased variance, eps=1e-5), affine. f32 math."""
  mu = jnp.mean(x, axis=-1, keepdims=True)
  var = jnp.mean((x - mu) ** 2, axis=-1, keepdims=True)
  return (x - mu) * lax.rsqrt(var + LN_EPS) * g + b


# ---------------------------------------------------------------------------
# Combined causal + (head, batch) block mask, precomputed host-side (numpy).
# Row/col index r = h*(B*C) + b*C + c  (head-major flattening of Q/K/V rows).
# ---------------------------------------------------------------------------
def _build_attn_mask(batch, context, heads):
  n = heads * batch * context
  r = np.arange(n)
  h = r // (batch * context)
  b = (r // context) % batch
  c = r % context
  ok = ((h[:, None] == h[None, :]) & (b[:, None] == b[None, :])
        & (c[None, :] <= c[:, None]))
  return np.where(ok, 0.0, -np.inf).astype(np.float32)


# ---------------------------------------------------------------------------
# Fused forward kernel: pos-add + L transformer layers + unembed.
# ---------------------------------------------------------------------------
def make_fused_kernel(heads, head_dim, layers):
  rows = heads * head_dim
  scale = float(head_dim) ** -0.5

  def kernel(x0_ref, pos_ref, mask_ref,
             pre_g_ref, pre_b_ref,
             wq_ref, wk_ref, wv_ref,
             ln_g_ref, ln_b_ref, w1_ref, w2_ref,
             wu_ref, o_ref):
    B, C, D = x0_ref.shape                        # static
    BC = B * C

    # positional embedding add, then flatten (batch, ctx) rows
    x = (x0_ref[...] + pos_ref[...]).reshape(BC, D)      # f32 (BC, D)
    mask = mask_ref[...]                                  # (H*BC, H*BC), hoisted

    for i in range(layers):                               # static unroll
      # inter-layer LayerNorm (absent before layer 0)
      xin = _layernorm(x, pre_g_ref[i], pre_b_ref[i]) if i > 0 else x

      # Q / K / V projections: (BC, D) @ (rows, D)^T -> (BC, rows)
      q = _mm_t(xin, wq_ref[i]) * scale                   # scale folded into Q
      k = _mm_t(xin, wk_ref[i])
      v = _mm_t(xin, wv_ref[i])

      # head-major flatten to (H*BC, head_dim); row order (head, batch, ctx)
      qf = jnp.concatenate(
          [q[:, h * head_dim:(h + 1) * head_dim] for h in range(heads)], axis=0)
      kf = jnp.concatenate(
          [k[:, h * head_dim:(h + 1) * head_dim] for h in range(heads)], axis=0)
      vf = jnp.concatenate(
          [v[:, h * head_dim:(h + 1) * head_dim] for h in range(heads)], axis=0)

      # single (H*BC, H*BC) score matmul + combined causal/block mask
      s = _mm_t(qf, kf) + mask
      s = s - jnp.max(s, axis=-1, keepdims=True)
      p = jnp.exp(s)                                      # f32 softmax math
      p = p * pl.reciprocal(jnp.sum(p, axis=-1, keepdims=True), approx=True)

      # single PV matmul: (H*BC, H*BC) @ (H*BC, head_dim)
      y = _mm(p, vf)                                      # (H*BC, head_dim)

      # back to (BC, rows) with columns ordered (head, head_dim)
      ycat = jnp.concatenate(
          [y[h * BC:(h + 1) * BC, :] for h in range(heads)], axis=1)

      # proj MLP: LayerNorm(rows) -> Linear(rows,4*rows) -> ReLU -> Linear(4*rows,D)
      hpre = _layernorm(ycat, ln_g_ref[i], ln_b_ref[i])
      h1 = jnp.maximum(_mm_t(hpre, w1_ref[i]), 0.0)       # (BC, 4*rows)
      mlp = _mm_t(h1, w2_ref[i])                          # (BC, D)

      x = mlp + xin                                       # residual (post pre-norm)

    # lane-dense unembed store: (BC, LOGIT_PAD), wu zero-padded to LOGIT_PAD rows
    o_ref[...] = _mm_t(x, wu_ref[...])

  return kernel


# ---------------------------------------------------------------------------
# Wrapper
# ---------------------------------------------------------------------------
def _vmem():
  return pl.BlockSpec(memory_space=pltpu.MemorySpace.VMEM)


@functools.partial(jax.jit, static_argnames=('heads', 'head_dim'))
def transformer_forward(toks, params, *, heads, head_dim):
  B, C = toks.shape
  layers = len(params['layers'])
  rows = heads * head_dim
  bf = jnp.bfloat16

  # glue: embedding gather stays in plain JAX
  x0 = params['tok_embed'][toks]                              # (B, C, D) f32
  pos = params['pos_embed'][None].astype(jnp.float32)         # (1, C, D)

  # stack per-layer weights along a leading L axis (matmul weights in bf16,
  # LayerNorm affine params in f32 and lane-aligned 2-D shape)
  def stack(name, dtype):
    return jnp.stack([lp[name] for lp in params['layers']]).astype(dtype)

  pre_g = stack('pre_g', jnp.float32).reshape(layers, 1, DIM)
  pre_b = stack('pre_b', jnp.float32).reshape(layers, 1, DIM)
  ln_g = stack('ln_g', jnp.float32).reshape(layers, 1, rows)
  ln_b = stack('ln_b', jnp.float32).reshape(layers, 1, rows)
  wq, wk, wv = stack('wq', bf), stack('wk', bf), stack('wv', bf)
  w1, w2 = stack('w1', bf), stack('w2', bf)

  # zero-pad unembed weight to a lane-dense (LOGIT_PAD, D) slab
  wu = jnp.zeros((LOGIT_PAD, DIM), bf).at[:NTOK].set(
      params['unembed'].astype(bf))

  # combined causal + (head,batch)-block mask, built once in numpy (constant)
  mask = jnp.asarray(_build_attn_mask(B, C, heads))

  kernel = make_fused_kernel(heads, head_dim, layers)
  args = (x0, pos, mask, pre_g, pre_b, wq, wk, wv, ln_g, ln_b, w1, w2, wu)
  out = pl.pallas_call(
      kernel,
      out_shape=jax.ShapeDtypeStruct((B * C, LOGIT_PAD), jnp.float32),
      in_specs=[_vmem()] * len(args),
      out_specs=_vmem(),
  )(*args)
  return out[:, :NTOK].reshape(B, C, NTOK)


# ---------------------------------------------------------------------------
# Deterministic parameter init (matches the PyTorch module's shapes)
# ---------------------------------------------------------------------------
def init_params(key, heads, head_dim, layers):
  rows = heads * head_dim
  ks = iter(jax.random.split(key, 4 + 6 * layers))

  def lin(k, out_f, in_f):
    return (jax.random.normal(k, (out_f, in_f), jnp.float32)
            * (in_f ** -0.5)).astype(jnp.float32)

  params = {
      'tok_embed': jax.random.normal(next(ks), (NTOK, DIM), jnp.float32),
      'pos_embed': jax.random.normal(next(ks), (CONTEXT, DIM), jnp.float32)
                   * (DIM ** -0.5),
      'unembed': lin(next(ks), NTOK, DIM),
      'layers': [],
  }
  for _ in range(layers):
    lp = {
        'pre_g': jnp.ones((DIM,), jnp.float32),      # inter-layer LayerNorm(DIM)
        'pre_b': jnp.zeros((DIM,), jnp.float32),
        'wq': lin(next(ks), rows, DIM),
        'wk': lin(next(ks), rows, DIM),
        'wv': lin(next(ks), rows, DIM),
        'ln_g': jnp.ones((rows,), jnp.float32),      # LayerNorm(rows) in proj MLP
        'ln_b': jnp.zeros((rows,), jnp.float32),
        'w1': lin(next(ks), rows * 4, rows),
        'w2': lin(next(ks), DIM, rows * 4),
    }
    params['layers'].append(lp)
  return params


# ---------------------------------------------------------------------------
# Pure-JAX f32 reference (mirrors the PyTorch forward exactly)
# ---------------------------------------------------------------------------
def _ref_ln(x, g, b):
  mu = jnp.mean(x, axis=-1, keepdims=True)
  var = jnp.mean((x - mu) ** 2, axis=-1, keepdims=True)
  return (x - mu) / jnp.sqrt(var + LN_EPS) * g + b


def ref_forward(toks, params, heads, head_dim):
  x = params['tok_embed'][toks] + params['pos_embed'][None, :, :]
  B, C, D = x.shape
  mask = jnp.where(jnp.triu(jnp.ones((C, C), bool), 1), -jnp.inf, 0.0)
  for i, lp in enumerate(params['layers']):
    if i > 0:
      x = _ref_ln(x, lp['pre_g'], lp['pre_b'])
    def remap(a):
      return a.reshape(B, C, heads, head_dim).transpose(0, 2, 1, 3)
    Q, K, V = (remap(x @ lp[w].T) for w in ('wq', 'wk', 'wv'))
    a = jnp.einsum('bhqd,bhkd->bhqk', Q, K) * head_dim ** -0.5 + mask
    s = jax.nn.softmax(a, axis=-1)
    y = jnp.einsum('bhqk,bhkd->bhqd', s, V).transpose(0, 2, 1, 3)
    y = y.reshape(B, C, heads * head_dim)
    h = _ref_ln(y, lp['ln_g'], lp['ln_b'])
    h = jax.nn.relu(h @ lp['w1'].T) @ lp['w2'].T
    x = h + x
  return x @ params['unembed'].T


# ---------------------------------------------------------------------------
if __name__ == "__main__":
  heads, head_dim, layers = 4, 8, 2
  batch = 2

  key = jax.random.PRNGKey(0)
  kp, kt = jax.random.split(key)
  params = init_params(kp, heads, head_dim, layers)
  toks = jax.random.randint(kt, (batch, CONTEXT), 0, NTOK, dtype=jnp.int32)

  logits = transformer_forward(toks, params, heads=heads, head_dim=head_dim)
  logits = jax.block_until_ready(logits)

  assert logits.shape == (batch, CONTEXT, NTOK)
  assert bool(jnp.all(jnp.isfinite(logits)))

  # Reference is full f32; the kernel uses bf16 MXU operands, so allow a
  # bf16-level elementwise tolerance plus a tight aggregate (Frobenius) check.
  ref = ref_forward(toks, params, heads, head_dim)
  max_err = float(jnp.max(jnp.abs(logits - ref)))
  rel_fro = float(jnp.linalg.norm(logits - ref) / jnp.linalg.norm(ref))
  assert jnp.allclose(logits, ref, rtol=5e-2, atol=5e-2), (max_err, rel_fro)
  assert rel_fro < 2e-2, (max_err, rel_fro)

  print("KERNEL_OK")
</pallas_src>

<mosaic_0001>
module attributes {stable_mosaic.version = 11 : i64} {
  func.func @kernel(%arg0: memref<2x6x32xf32, #tpu.memory_space<vmem>>, %arg1: memref<1x6x32xf32, #tpu.memory_space<vmem>>, %arg2: memref<48x48xf32, #tpu.memory_space<vmem>>, %arg3: memref<2x1x32xf32, #tpu.memory_space<vmem>>, %arg4: memref<2x1x32xf32, #tpu.memory_space<vmem>>, %arg5: memref<2x32x32xbf16, #tpu.memory_space<vmem>>, %arg6: memref<2x32x32xbf16, #tpu.memory_space<vmem>>, %arg7: memref<2x32x32xbf16, #tpu.memory_space<vmem>>, %arg8: memref<2x1x32xf32, #tpu.memory_space<vmem>>, %arg9: memref<2x1x32xf32, #tpu.memory_space<vmem>>, %arg10: memref<2x128x32xbf16, #tpu.memory_space<vmem>>, %arg11: memref<2x32x128xbf16, #tpu.memory_space<vmem>>, %arg12: memref<128x32xbf16, #tpu.memory_space<vmem>>, %arg13: memref<12x128xf32, #tpu.memory_space<vmem>>) attributes {dimension_semantics = [], scalar_prefetch = 0 : i64, scratch_operands = 0 : i64, tpu.core_type = #tpu.core_type<tc>} {
    %c0 = arith.constant 0 : index
    %c0_0 = arith.constant 0 : index
    %c0_1 = arith.constant 0 : index
    %0 = vector.load %arg0[%c0, %c0_0, %c0_1] : memref<2x6x32xf32, #tpu.memory_space<vmem>>, vector<2x6x32xf32>
    %c0_2 = arith.constant 0 : index
    %c0_3 = arith.constant 0 : index
    %c0_4 = arith.constant 0 : index
    %1 = vector.load %arg1[%c0_2, %c0_3, %c0_4] : memref<1x6x32xf32, #tpu.memory_space<vmem>>, vector<1x6x32xf32>
    %2 = vector.broadcast %1 : vector<1x6x32xf32> to vector<2x6x32xf32>
    %3 = arith.addf %0, %2 : vector<2x6x32xf32>
    %4 = vector.shape_cast %3 : vector<2x6x32xf32> to vector<12x32xf32>
    %c0_5 = arith.constant 0 : index
    %c0_6 = arith.constant 0 : index
    %5 = vector.load %arg2[%c0_5, %c0_6] : memref<48x48xf32, #tpu.memory_space<vmem>>, vector<48x48xf32>
    %c0_7 = arith.constant 0 : index
    %c0_8 = arith.constant 0 : index
    %c0_9 = arith.constant 0 : index
    %6 = vector.load %arg5[%c0_7, %c0_8, %c0_9] : memref<2x32x32xbf16, #tpu.memory_space<vmem>>, vector<1x32x32xbf16>
    %7 = vector.shape_cast %6 : vector<1x32x32xbf16> to vector<32x32xbf16>
    %8 = arith.truncf %4 : vector<12x32xf32> to vector<12x32xbf16>
    %cst = arith.constant dense<0.000000e+00> : vector<12x32xf32>
    %9 = tpu.matmul %8, %7, %cst {dimension_numbers = #tpu.dot_dimension_numbers<[1], [1], [0], [0], [0, 0, 1, 0], [], []>} : vector<12x32xbf16>, vector<32x32xbf16>, vector<12x32xf32> -> vector<12x32xf32>
    %cst_10 = arith.constant 0.353553385 : f32
    %10 = vector.broadcast %cst_10 : f32 to vector<12x32xf32>
    %11 = arith.mulf %9, %10 : vector<12x32xf32>
    %c0_11 = arith.constant 0 : index
    %c0_12 = arith.constant 0 : index
    %c0_13 = arith.constant 0 : index
    %12 = vector.load %arg6[%c0_11, %c0_12, %c0_13] : memref<2x32x32xbf16, #tpu.memory_space<vmem>>, vector<1x32x32xbf16>
    %13 = vector.shape_cast %12 : vector<1x32x32xbf16> to vector<32x32xbf16>
    %14 = arith.truncf %4 : vector<12x32xf32> to vector<12x32xbf16>
    %cst_14 = arith.constant dense<0.000000e+00> : vector<12x32xf32>
    %15 = tpu.matmul %14, %13, %cst_14 {dimension_numbers = #tpu.dot_dimension_numbers<[1], [1], [0], [0], [0, 0, 1, 0], [], []>} : vector<12x32xbf16>, vector<32x32xbf16>, vector<12x32xf32> -> vector<12x32xf32>
    %c0_15 = arith.constant 0 : index
    %c0_16 = arith.constant 0 : index
    %c0_17 = arith.constant 0 : index
    %16 = vector.load %arg7[%c0_15, %c0_16, %c0_17] : memref<2x32x32xbf16, #tpu.memory_space<vmem>>, vector<1x32x32xbf16>
    %17 = vector.shape_cast %16 : vector<1x32x32xbf16> to vector<32x32xbf16>
    %18 = arith.truncf %4 : vector<12x32xf32> to vector<12x32xbf16>
    %cst_18 = arith.constant dense<0.000000e+00> : vector<12x32xf32>
    %19 = tpu.matmul %18, %17, %cst_18 {dimension_numbers = #tpu.dot_dimension_numbers<[1], [1], [0], [0], [0, 0, 1, 0], [], []>} : vector<12x32xbf16>, vector<32x32xbf16>, vector<12x32xf32> -> vector<12x32xf32>
    %20 = vector.extract_strided_slice %11 {offsets = [0, 0], sizes = [12, 8], strides = [1, 1]} : vector<12x32xf32> to vector<12x8xf32>
    %21 = vector.extract_strided_slice %11 {offsets = [0, 8], sizes = [12, 8], strides = [1, 1]} : vector<12x32xf32> to vector<12x8xf32>
    %22 = vector.extract_strided_slice %11 {offsets = [0, 16], sizes = [12, 8], strides = [1, 1]} : vector<12x32xf32> to vector<12x8xf32>
    %23 = vector.extract_strided_slice %11 {offsets = [0, 24], sizes = [12, 8], strides = [1, 1]} : vector<12x32xf32> to vector<12x8xf32>
    %24 = tpu.concatenate %20, %21, %22, %23 in 0 : vector<12x8xf32>, vector<12x8xf32>, vector<12x8xf32>, vector<12x8xf32> -> vector<48x8xf32>
    %25 = vector.extract_strided_slice %15 {offsets = [0, 0], sizes = [12, 8], strides = [1, 1]} : vector<12x32xf32> to vector<12x8xf32>
    %26 = vector.extract_strided_slice %15 {offsets = [0, 8], sizes = [12, 8], strides = [1, 1]} : vector<12x32xf32> to vector<12x8xf32>
    %27 = vector.extract_strided_slice %15 {offsets = [0, 16], sizes = [12, 8], strides = [1, 1]} : vector<12x32xf32> to vector<12x8xf32>
    %28 = vector.extract_strided_slice %15 {offsets = [0, 24], sizes = [12, 8], strides = [1, 1]} : vector<12x32xf32> to vector<12x8xf32>
    %29 = tpu.concatenate %25, %26, %27, %28 in 0 : vector<12x8xf32>, vector<12x8xf32>, vector<12x8xf32>, vector<12x8xf32> -> vector<48x8xf32>
    %30 = vector.extract_strided_slice %19 {offsets = [0, 0], sizes = [12, 8], strides = [1, 1]} : vector<12x32xf32> to vector<12x8xf32>
    %31 = vector.extract_strided_slice %19 {offsets = [0, 8], sizes = [12, 8], strides = [1, 1]} : vector<12x32xf32> to vector<12x8xf32>
    %32 = vector.extract_strided_slice %19 {offsets = [0, 16], sizes = [12, 8], strides = [1, 1]} : vector<12x32xf32> to vector<12x8xf32>
    %33 = vector.extract_strided_slice %19 {offsets = [0, 24], sizes = [12, 8], strides = [1, 1]} : vector<12x32xf32> to vector<12x8xf32>
    %34 = tpu.concatenate %30, %31, %32, %33 in 0 : vector<12x8xf32>, vector<12x8xf32>, vector<12x8xf32>, vector<12x8xf32> -> vector<48x8xf32>
    %35 = arith.truncf %24 : vector<48x8xf32> to vector<48x8xbf16>
    %36 = arith.truncf %29 : vector<48x8xf32> to vector<48x8xbf16>
    %cst_19 = arith.constant dense<0.000000e+00> : vector<48x48xf32>
    %37 = tpu.matmul %35, %36, %cst_19 {dimension_numbers = #tpu.dot_dimension_numbers<[1], [1], [0], [0], [0, 0, 1, 0], [], []>} : vector<48x8xbf16>, vector<48x8xbf16>, vector<48x48xf32> -> vector<48x48xf32>
    %38 = arith.addf %37, %5 : vector<48x48xf32>
    %cst_20 = arith.constant dense<0xFF800000> : vector<48xf32>
    %39 = vector.multi_reduction <maximumf>, %38, %cst_20 [1] : vector<48x48xf32> to vector<48xf32>
    %40 = vector.shape_cast %39 : vector<48xf32> to vector<48x1xf32>
    %41 = vector.broadcast %40 : vector<48x1xf32> to vector<48x48xf32>
    %42 = arith.subf %38, %41 : vector<48x48xf32>
    %43 = math.exp %42 : vector<48x48xf32>
    %cst_21 = arith.constant dense<0.000000e+00> : vector<48xf32>
    %44 = vector.multi_reduction <add>, %43, %cst_21 [1] : vector<48x48xf32> to vector<48xf32>
    %45 = vector.shape_cast %44 : vector<48xf32> to vector<48x1xf32>
    %46 = tpu.reciprocal %45 {approx = true} : vector<48x1xf32> -> vector<48x1xf32>
    %47 = vector.broadcast %46 : vector<48x1xf32> to vector<48x48xf32>
    %48 = arith.mulf %43, %47 : vector<48x48xf32>
    %49 = arith.truncf %48 : vector<48x48xf32> to vector<48x48xbf16>
    %50 = arith.truncf %34 : vector<48x8xf32> to vector<48x8xbf16>
    %cst_22 = arith.constant dense<0.000000e+00> : vector<48x8xf32>
    %51 = tpu.matmul %49, %50, %cst_22 {dimension_numbers = #tpu.dot_dimension_numbers<[1], [0], [0], [1], [0, 0, 1, 1], [], []>} : vector<48x48xbf16>, vector<48x8xbf16>, vector<48x8xf32> -> vector<48x8xf32>
    %52 = vector.extract_strided_slice %51 {offsets = [0, 0], sizes = [12, 8], strides = [1, 1]} : vector<48x8xf32> to vector<12x8xf32>
    %53 = vector.extract_strided_slice %51 {offsets = [12, 0], sizes = [12, 8], strides = [1, 1]} : vector<48x8xf32> to vector<12x8xf32>
    %54 = vector.extract_strided_slice %51 {offsets = [24, 0], sizes = [12, 8], strides = [1, 1]} : vector<48x8xf32> to vector<12x8xf32>
    %55 = vector.extract_strided_slice %51 {offsets = [36, 0], sizes = [12, 8], strides = [1, 1]} : vector<48x8xf32> to vector<12x8xf32>
    %56 = tpu.concatenate %52, %53, %54, %55 in 1 : vector<12x8xf32>, vector<12x8xf32>, vector<12x8xf32>, vector<12x8xf32> -> vector<12x32xf32>
    %c0_23 = arith.constant 0 : index
    %c0_24 = arith.constant 0 : index
    %c0_25 = arith.constant 0 : index
    %57 = vector.load %arg8[%c0_23, %c0_24, %c0_25] : memref<2x1x32xf32, #tpu.memory_space<vmem>>, vector<1x1x32xf32>
    %58 = vector.shape_cast %57 : vector<1x1x32xf32> to vector<1x32xf32>
    %c0_26 = arith.constant 0 : index
    %c0_27 = arith.constant 0 : index
    %c0_28 = arith.constant 0 : index
    %59 = vector.load %arg9[%c0_26, %c0_27, %c0_28] : memref<2x1x32xf32, #tpu.memory_space<vmem>>, vector<1x1x32xf32>
    %60 = vector.shape_cast %59 : vector<1x1x32xf32> to vector<1x32xf32>
    %cst_29 = arith.constant dense<0.000000e+00> : vector<12xf32>
    %61 = vector.multi_reduction <add>, %56, %cst_29 [1] : vector<12x32xf32> to vector<12xf32>
    %62 = vector.shape_cast %61 : vector<12xf32> to vector<12x1xf32>
    %cst_30 = arith.constant 3.200000e+01 : f32
    %63 = vector.broadcast %cst_30 : f32 to vector<12x1xf32>
    %64 = arith.divf %62, %63 : vector<12x1xf32>
    %65 = vector.broadcast %64 : vector<12x1xf32> to vector<12x32xf32>
    %66 = arith.subf %56, %65 : vector<12x32xf32>
    %67 = arith.mulf %66, %66 : vector<12x32xf32>
    %cst_31 = arith.constant dense<0.000000e+00> : vector<12xf32>
    %68 = vector.multi_reduction <add>, %67, %cst_31 [1] : vector<12x32xf32> to vector<12xf32>
    %69 = vector.shape_cast %68 : vector<12xf32> to vector<12x1xf32>
    %cst_32 = arith.constant 3.200000e+01 : f32
    %70 = vector.broadcast %cst_32 : f32 to vector<12x1xf32>
    %71 = arith.divf %69, %70 : vector<12x1xf32>
    %72 = vector.broadcast %64 : vector<12x1xf32> to vector<12x32xf32>
    %73 = arith.subf %56, %72 : vector<12x32xf32>
    %cst_33 = arith.constant 9.99999974E-6 : f32
    %74 = vector.broadcast %cst_33 : f32 to vector<12x1xf32>
    %75 = arith.addf %71, %74 : vector<12x1xf32>
    %76 = math.rsqrt %75 : vector<12x1xf32>
    %77 = vector.broadcast %76 : vector<12x1xf32> to vector<12x32xf32>
    %78 = arith.mulf %73, %77 : vector<12x32xf32>
    %79 = vector.broadcast %58 : vector<1x32xf32> to vector<12x32xf32>
    %80 = arith.mulf %78, %79 : vector<12x32xf32>
    %81 = vector.broadcast %60 : vector<1x32xf32> to vector<12x32xf32>
    %82 = arith.addf %80, %81 : vector<12x32xf32>
    %c0_34 = arith.constant 0 : index
    %c0_35 = arith.constant 0 : index
    %c0_36 = arith.constant 0 : index
    %83 = vector.load %arg10[%c0_34, %c0_35, %c0_36] : memref<2x128x32xbf16, #tpu.memory_space<vmem>>, vector<1x128x32xbf16>
    %84 = vector.shape_cast %83 : vector<1x128x32xbf16> to vector<128x32xbf16>
    %85 = arith.truncf %82 : vector<12x32xf32> to vector<12x32xbf16>
    %cst_37 = arith.constant dense<0.000000e+00> : vector<12x128xf32>
    %86 = tpu.matmul %85, %84, %cst_37 {dimension_numbers = #tpu.dot_dimension_numbers<[1], [1], [0], [0], [0, 0, 1, 0], [], []>} : vector<12x32xbf16>, vector<128x32xbf16>, vector<12x128xf32> -> vector<12x128xf32>
    %cst_38 = arith.constant 0.000000e+00 : f32
    %87 = vector.broadcast %cst_38 : f32 to vector<12x128xf32>
    %88 = arith.maximumf %86, %87 : vector<12x128xf32>
    %c0_39 = arith.constant 0 : index
    %c0_40 = arith.constant 0 : index
    %c0_41 = arith.constant 0 : index
    %89 = vector.load %arg11[%c0_39, %c0_40, %c0_41] : memref<2x32x128xbf16, #tpu.memory_space<vmem>>, vector<1x32x128xbf16>
    %90 = vector.shape_cast %89 : vector<1x32x128xbf16> to vector<32x128xbf16>
    %91 = arith.truncf %88 : vector<12x128xf32> to vector<12x128xbf16>
    %cst_42 = arith.constant dense<0.000000e+00> : vector<12x32xf32>
    %92 = tpu.matmul %91, %90, %cst_42 {dimension_numbers = #tpu.dot_dimension_numbers<[1], [1], [0], [0], [0, 0, 1, 0], [], []>} : vector<12x128xbf16>, vector<32x128xbf16>, vector<12x32xf32> -> vector<12x32xf32>
    %93 = arith.addf %92, %4 : vector<12x32xf32>
    %c1 = arith.constant 1 : index
    %c0_43 = arith.constant 0 : index
    %c0_44 = arith.constant 0 : index
    %94 = vector.load %arg3[%c1, %c0_43, %c0_44] : memref<2x1x32xf32, #tpu.memory_space<vmem>>, vector<1x1x32xf32>
    %95 = vector.shape_cast %94 : vector<1x1x32xf32> to vector<1x32xf32>
    %c1_45 = arith.constant 1 : index
    %c0_46 = arith.constant 0 : index
    %c0_47 = arith.constant 0 : index
    %96 = vector.load %arg4[%c1_45, %c0_46, %c0_47] : memref<2x1x32xf32, #tpu.memory_space<vmem>>, vector<1x1x32xf32>
    %97 = vector.shape_cast %96 : vector<1x1x32xf32> to vector<1x32xf32>
    %cst_48 = arith.constant dense<0.000000e+00> : vector<12xf32>
    %98 = vector.multi_reduction <add>, %93, %cst_48 [1] : vector<12x32xf32> to vector<12xf32>
    %99 = vector.shape_cast %98 : vector<12xf32> to vector<12x1xf32>
    %cst_49 = arith.constant 3.200000e+01 : f32
    %100 = vector.broadcast %cst_49 : f32 to vector<12x1xf32>
    %101 = arith.divf %99, %100 : vector<12x1xf32>
    %102 = vector.broadcast %101 : vector<12x1xf32> to vector<12x32xf32>
    %103 = arith.subf %93, %102 : vector<12x32xf32>
    %104 = arith.mulf %103, %103 : vector<12x32xf32>
    %cst_50 = arith.constant dense<0.000000e+00> : vector<12xf32>
    %105 = vector.multi_reduction <add>, %104, %cst_50 [1] : vector<12x32xf32> to vector<12xf32>
    %106 = vector.shape_cast %105 : vector<12xf32> to vector<12x1xf32>
    %cst_51 = arith.constant 3.200000e+01 : f32
    %107 = vector.broadcast %cst_51 : f32 to vector<12x1xf32>
    %108 = arith.divf %106, %107 : vector<12x1xf32>
    %109 = vector.broadcast %101 : vector<12x1xf32> to vector<12x32xf32>
    %110 = arith.subf %93, %109 : vector<12x32xf32>
    %cst_52 = arith.constant 9.99999974E-6 : f32
    %111 = vector.broadcast %cst_52 : f32 to vector<12x1xf32>
    %112 = arith.addf %108, %111 : vector<12x1xf32>
    %113 = math.rsqrt %112 : vector<12x1xf32>
    %114 = vector.broadcast %113 : vector<12x1xf32> to vector<12x32xf32>
    %115 = arith.mulf %110, %114 : vector<12x32xf32>
    %116 = vector.broadcast %95 : vector<1x32xf32> to vector<12x32xf32>
    %117 = arith.mulf %115, %116 : vector<12x32xf32>
    %118 = vector.broadcast %97 : vector<1x32xf32> to vector<12x32xf32>
    %119 = arith.addf %117, %118 : vector<12x32xf32>
    %c1_53 = arith.constant 1 : index
    %c0_54 = arith.constant 0 : index
    %c0_55 = arith.constant 0 : index
    %120 = vector.load %arg5[%c1_53, %c0_54, %c0_55] : memref<2x32x32xbf16, #tpu.memory_space<vmem>>, vector<1x32x32xbf16>
    %121 = vector.shape_cast %120 : vector<1x32x32xbf16> to vector<32x32xbf16>
    %122 = arith.truncf %119 : vector<12x32xf32> to vector<12x32xbf16>
    %cst_56 = arith.constant dense<0.000000e+00> : vector<12x32xf32>
    %123 = tpu.matmul %122, %121, %cst_56 {dimension_numbers = #tpu.dot_dimension_numbers<[1], [1], [0], [0], [0, 0, 1, 0], [], []>} : vector<12x32xbf16>, vector<32x32xbf16>, vector<12x32xf32> -> vector<12x32xf32>
    %cst_57 = arith.constant 0.353553385 : f32
    %124 = vector.broadcast %cst_57 : f32 to vector<12x32xf32>
    %125 = arith.mulf %123, %124 : vector<12x32xf32>
    %c1_58 = arith.constant 1 : index
    %c0_59 = arith.constant 0 : index
    %c0_60 = arith.constant 0 : index
    %126 = vector.load %arg6[%c1_58, %c0_59, %c0_60] : memref<2x32x32xbf16, #tpu.memory_space<vmem>>, vector<1x32x32xbf16>
    %127 = vector.shape_cast %126 : vector<1x32x32xbf16> to vector<32x32xbf16>
    %128 = arith.truncf %119 : vector<12x32xf32> to vector<12x32xbf16>
    %cst_61 = arith.constant dense<0.000000e+00> : vector<12x32xf32>
    %129 = tpu.matmul %128, %127, %cst_61 {dimension_numbers = #tpu.dot_dimension_numbers<[1], [1], [0], [0], [0, 0, 1, 0], [], []>} : vector<12x32xbf16>, vector<32x32xbf16>, vector<12x32xf32> -> vector<12x32xf32>
    %c1_62 = arith.constant 1 : index
    %c0_63 = arith.constant 0 : index
    %c0_64 = arith.constant 0 : index
    %130 = vector.load %arg7[%c1_62, %c0_63, %c0_64] : memref<2x32x32xbf16, #tpu.memory_space<vmem>>, vector<1x32x32xbf16>
    %131 = vector.shape_cast %130 : vector<1x32x32xbf16> to vector<32x32xbf16>
    %132 = arith.truncf %119 : vector<12x32xf32> to vector<12x32xbf16>
    %cst_65 = arith.constant dense<0.000000e+00> : vector<12x32xf32>
    %133 = tpu.matmul %132, %131, %cst_65 {dimension_numbers = #tpu.dot_dimension_numbers<[1], [1], [0], [0], [0, 0, 1, 0], [], []>} : vector<12x32xbf16>, vector<32x32xbf16>, vector<12x32xf32> -> vector<12x32xf32>
    %134 = vector.extract_strided_slice %125 {offsets = [0, 0], sizes = [12, 8], strides = [1, 1]} : vector<12x32xf32> to vector<12x8xf32>
    %135 = vector.extract_strided_slice %125 {offsets = [0, 8], sizes = [12, 8], strides = [1, 1]} : vector<12x32xf32> to vector<12x8xf32>
    %136 = vector.extract_strided_slice %125 {offsets = [0, 16], sizes = [12, 8], strides = [1, 1]} : vector<12x32xf32> to vector<12x8xf32>
    %137 = vector.extract_strided_slice %125 {offsets = [0, 24], sizes = [12, 8], strides = [1, 1]} : vector<12x32xf32> to vector<12x8xf32>
    %138 = tpu.concatenate %134, %135, %136, %137 in 0 : vector<12x8xf32>, vector<12x8xf32>, vector<12x8xf32>, vector<12x8xf32> -> vector<48x8xf32>
    %139 = vector.extract_strided_slice %129 {offsets = [0, 0], sizes = [12, 8], strides = [1, 1]} : vector<12x32xf32> to vector<12x8xf32>
    %140 = vector.extract_strided_slice %129 {offsets = [0, 8], sizes = [12, 8], strides = [1, 1]} : vector<12x32xf32> to vector<12x8xf32>
    %141 = vector.extract_strided_slice %129 {offsets = [0, 16], sizes = [12, 8], strides = [1, 1]} : vector<12x32xf32> to vector<12x8xf32>
    %142 = vector.extract_strided_slice %129 {offsets = [0, 24], sizes = [12, 8], strides = [1, 1]} : vector<12x32xf32> to vector<12x8xf32>
    %143 = tpu.concatenate %139, %140, %141, %142 in 0 : vector<12x8xf32>, vector<12x8xf32>, vector<12x8xf32>, vector<12x8xf32> -> vector<48x8xf32>
    %144 = vector.extract_strided_slice %133 {offsets = [0, 0], sizes = [12, 8], strides = [1, 1]} : vector<12x32xf32> to vector<12x8xf32>
    %145 = vector.extract_strided_slice %133 {offsets = [0, 8], sizes = [12, 8], strides = [1, 1]} : vector<12x32xf32> to vector<12x8xf32>
    %146 = vector.extract_strided_slice %133 {offsets = [0, 16], sizes = [12, 8], strides = [1, 1]} : vector<12x32xf32> to vector<12x8xf32>
    %147 = vector.extract_strided_slice %133 {offsets = [0, 24], sizes = [12, 8], strides = [1, 1]} : vector<12x32xf32> to vector<12x8xf32>
    %148 = tpu.concatenate %144, %145, %146, %147 in 0 : vector<12x8xf32>, vector<12x8xf32>, vector<12x8xf32>, vector<12x8xf32> -> vector<48x8xf32>
    %149 = arith.truncf %138 : vector<48x8xf32> to vector<48x8xbf16>
    %150 = arith.truncf %143 : vector<48x8xf32> to vector<48x8xbf16>
    %cst_66 = arith.constant dense<0.000000e+00> : vector<48x48xf32>
    %151 = tpu.matmul %149, %150, %cst_66 {dimension_numbers = #tpu.dot_dimension_numbers<[1], [1], [0], [0], [0, 0, 1, 0], [], []>} : vector<48x8xbf16>, vector<48x8xbf16>, vector<48x48xf32> -> vector<48x48xf32>
    %152 = arith.addf %151, %5 : vector<48x48xf32>
    %cst_67 = arith.constant dense<0xFF800000> : vector<48xf32>
    %153 = vector.multi_reduction <maximumf>, %152, %cst_67 [1] : vector<48x48xf32> to vector<48xf32>
    %154 = vector.shape_cast %153 : vector<48xf32> to vector<48x1xf32>
    %155 = vector.broadcast %154 : vector<48x1xf32> to vector<48x48xf32>
    %156 = arith.subf %152, %155 : vector<48x48xf32>
    %157 = math.exp %156 : vector<48x48xf32>
    %cst_68 = arith.constant dense<0.000000e+00> : vector<48xf32>
    %158 = vector.multi_reduction <add>, %157, %cst_68 [1] : vector<48x48xf32> to vector<48xf32>
    %159 = vector.shape_cast %158 : vector<48xf32> to vector<48x1xf32>
    %160 = tpu.reciprocal %159 {approx = true} : vector<48x1xf32> -> vector<48x1xf32>
    %161 = vector.broadcast %160 : vector<48x1xf32> to vector<48x48xf32>
    %162 = arith.mulf %157, %161 : vector<48x48xf32>
    %163 = arith.truncf %162 : vector<48x48xf32> to vector<48x48xbf16>
    %164 = arith.truncf %148 : vector<48x8xf32> to vector<48x8xbf16>
    %cst_69 = arith.constant dense<0.000000e+00> : vector<48x8xf32>
    %165 = tpu.matmul %163, %164, %cst_69 {dimension_numbers = #tpu.dot_dimension_numbers<[1], [0], [0], [1], [0, 0, 1, 1], [], []>} : vector<48x48xbf16>, vector<48x8xbf16>, vector<48x8xf32> -> vector<48x8xf32>
    %166 = vector.extract_strided_slice %165 {offsets = [0, 0], sizes = [12, 8], strides = [1, 1]} : vector<48x8xf32> to vector<12x8xf32>
    %167 = vector.extract_strided_slice %165 {offsets = [12, 0], sizes = [12, 8], strides = [1, 1]} : vector<48x8xf32> to vector<12x8xf32>
    %168 = vector.extract_strided_slice %165 {offsets = [24, 0], sizes = [12, 8], strides = [1, 1]} : vector<48x8xf32> to vector<12x8xf32>
    %169 = vector.extract_strided_slice %165 {offsets = [36, 0], sizes = [12, 8], strides = [1, 1]} : vector<48x8xf32> to vector<12x8xf32>
    %170 = tpu.concatenate %166, %167, %168, %169 in 1 : vector<12x8xf32>, vector<12x8xf32>, vector<12x8xf32>, vector<12x8xf32> -> vector<12x32xf32>
    %c1_70 = arith.constant 1 : index
    %c0_71 = arith.constant 0 : index
    %c0_72 = arith.constant 0 : index
    %171 = vector.load %arg8[%c1_70, %c0_71, %c0_72] : memref<2x1x32xf32, #tpu.memory_space<vmem>>, vector<1x1x32xf32>
    %172 = vector.shape_cast %171 : vector<1x1x32xf32> to vector<1x32xf32>
    %c1_73 = arith.constant 1 : index
    %c0_74 = arith.constant 0 : index
    %c0_75 = arith.constant 0 : index
    %173 = vector.load %arg9[%c1_73, %c0_74, %c0_75] : memref<2x1x32xf32, #tpu.memory_space<vmem>>, vector<1x1x32xf32>
    %174 = vector.shape_cast %173 : vector<1x1x32xf32> to vector<1x32xf32>
    %cst_76 = arith.constant dense<0.000000e+00> : vector<12xf32>
    %175 = vector.multi_reduction <add>, %170, %cst_76 [1] : vector<12x32xf32> to vector<12xf32>
    %176 = vector.shape_cast %175 : vector<12xf32> to vector<12x1xf32>
    %cst_77 = arith.constant 3.200000e+01 : f32
    %177 = vector.broadcast %cst_77 : f32 to vector<12x1xf32>
    %178 = arith.divf %176, %177 : vector<12x1xf32>
    %179 = vector.broadcast %178 : vector<12x1xf32> to vector<12x32xf32>
    %180 = arith.subf %170, %179 : vector<12x32xf32>
    %181 = arith.mulf %180, %180 : vector<12x32xf32>
    %cst_78 = arith.constant dense<0.000000e+00> : vector<12xf32>
    %182 = vector.multi_reduction <add>, %181, %cst_78 [1] : vector<12x32xf32> to vector<12xf32>
    %183 = vector.shape_cast %182 : vector<12xf32> to vector<12x1xf32>
    %cst_79 = arith.constant 3.200000e+01 : f32
    %184 = vector.broadcast %cst_79 : f32 to vector<12x1xf32>
    %185 = arith.divf %183, %184 : vector<12x1xf32>
    %186 = vector.broadcast %178 : vector<12x1xf32> to vector<12x32xf32>
    %187 = arith.subf %170, %186 : vector<12x32xf32>
    %cst_80 = arith.constant 9.99999974E-6 : f32
    %188 = vector.broadcast %cst_80 : f32 to vector<12x1xf32>
    %189 = arith.addf %185, %188 : vector<12x1xf32>
    %190 = math.rsqrt %189 : vector<12x1xf32>
    %191 = vector.broadcast %190 : vector<12x1xf32> to vector<12x32xf32>
    %192 = arith.mulf %187, %191 : vector<12x32xf32>
    %193 = vector.broadcast %172 : vector<1x32xf32> to vector<12x32xf32>
    %194 = arith.mulf %192, %193 : vector<12x32xf32>
    %195 = vector.broadcast %174 : vector<1x32xf32> to vector<12x32xf32>
    %196 = arith.addf %194, %195 : vector<12x32xf32>
    %c1_81 = arith.constant 1 : index
    %c0_82 = arith.constant 0 : index
    %c0_83 = arith.constant 0 : index
    %197 = vector.load %arg10[%c1_81, %c0_82, %c0_83] : memref<2x128x32xbf16, #tpu.memory_space<vmem>>, vector<1x128x32xbf16>
    %198 = vector.shape_cast %197 : vector<1x128x32xbf16> to vector<128x32xbf16>
    %199 = arith.truncf %196 : vector<12x32xf32> to vector<12x32xbf16>
    %cst_84 = arith.constant dense<0.000000e+00> : vector<12x128xf32>
    %200 = tpu.matmul %199, %198, %cst_84 {dimension_numbers = #tpu.dot_dimension_numbers<[1], [1], [0], [0], [0, 0, 1, 0], [], []>} : vector<12x32xbf16>, vector<128x32xbf16>, vector<12x128xf32> -> vector<12x128xf32>
    %cst_85 = arith.constant 0.000000e+00 : f32
    %201 = vector.broadcast %cst_85 : f32 to vector<12x128xf32>
    %202 = arith.maximumf %200, %201 : vector<12x128xf32>
    %c1_86 = arith.constant 1 : index
    %c0_87 = arith.constant 0 : index
    %c0_88 = arith.constant 0 : index
    %203 = vector.load %arg11[%c1_86, %c0_87, %c0_88] : memref<2x32x128xbf16, #tpu.memory_space<vmem>>, vector<1x32x128xbf16>
    %204 = vector.shape_cast %203 : vector<1x32x128xbf16> to vector<32x128xbf16>
    %205 = arith.truncf %202 : vector<12x128xf32> to vector<12x128xbf16>
    %cst_89 = arith.constant dense<0.000000e+00> : vector<12x32xf32>
    %206 = tpu.matmul %205, %204, %cst_89 {dimension_numbers = #tpu.dot_dimension_numbers<[1], [1], [0], [0], [0, 0, 1, 0], [], []>} : vector<12x128xbf16>, vector<32x128xbf16>, vector<12x32xf32> -> vector<12x32xf32>
    %207 = arith.addf %206, %119 : vector<12x32xf32>
    %c0_90 = arith.constant 0 : index
    %c0_91 = arith.constant 0 : index
    %208 = vector.load %arg12[%c0_90, %c0_91] : memref<128x32xbf16, #tpu.memory_space<vmem>>, vector<128x32xbf16>
    %209 = arith.truncf %207 : vector<12x32xf32> to vector<12x32xbf16>
    %cst_92 = arith.constant dense<0.000000e+00> : vector<12x128xf32>
    %210 = tpu.matmul %209, %208, %cst_92 {dimension_numbers = #tpu.dot_dimension_numbers<[1], [1], [0], [0], [0, 0, 1, 0], [], []>} : vector<12x32xbf16>, vector<128x32xbf16>, vector<12x128xf32> -> vector<12x128xf32>
    %c0_93 = arith.constant 0 : index
    %c0_94 = arith.constant 0 : index
    %211 = vector.load %arg13[%c0_93, %c0_94] : memref<12x128xf32, #tpu.memory_space<vmem>>, vector<12x128xf32>
    tpu.vector_store %arg13[%c0_93, %c0_94], %210 {strides = array<i32>} : memref<12x128xf32, #tpu.memory_space<vmem>>, vector<12x128xf32>,
    return
  }
}

</mosaic_0001>

<llo_original>
// kernel: transformer_forward.1
$region0: #{transformer_forward.1}
  #allocation0 [shape = 'u32[]', space=smem, size = 0x4, offset = 0x4, fixed_abs, tag = 'smem constant byte address 0x4 - core index']
  #allocation1 [shape = 'u32[144,128]{1,0:T(1,128)}', space=vmem, size = 0x12000, scoped, tag = 'internal scratch']
  %s0 = inlined_call_operand.vmem [shape: f32[2,6,32], index: 0, kind: input, shape index: {}]
  %s1 = inlined_call_operand.vmem [shape: f32[1,6,32], index: 1, kind: input, shape index: {}]
  %s2 = inlined_call_operand.vmem [shape: f32[48,48], index: 2, kind: input, shape index: {}]
  %s3 = inlined_call_operand.vmem [shape: f32[2,1,32], index: 3, kind: input, shape index: {}]
  %s4 = inlined_call_operand.vmem [shape: f32[2,1,32], index: 4, kind: input, shape index: {}]
  %s5 = inlined_call_operand.vmem [shape: bf16[2,32,32], index: 5, kind: input, shape index: {}]
  %s6 = inlined_call_operand.vmem [shape: bf16[2,32,32], index: 6, kind: input, shape index: {}]
  %s7 = inlined_call_operand.vmem [shape: bf16[2,32,32], index: 7, kind: input, shape index: {}]
  %s8 = inlined_call_operand.vmem [shape: f32[2,1,32], index: 8, kind: input, shape index: {}]
  %s9 = inlined_call_operand.vmem [shape: f32[2,1,32], index: 9, kind: input, shape index: {}]
  %s10 = inlined_call_operand.vmem [shape: bf16[2,128,32], index: 10, kind: input, shape index: {}]
  %s11 = inlined_call_operand.vmem [shape: bf16[2,32,128], index: 11, kind: input, shape index: {}]
  %s12 = inlined_call_operand.vmem [shape: bf16[128,32], index: 12, kind: input, shape index: {}]
  %s13 = inlined_call_operand.vmem [shape: f32[12,128], index: 13, kind: output, shape index: {}]
  %s14 = sld [smem:[#allocation0]]
  $region62: #{transformer_forward.1} parent=0
    _
  %s16 = ssub.s32 1, %s14
  %s17 = scalar_select 0, %s16, %s14
  // Predicated region
  $region2: #{transformer_forward.1} parent=0 // pred_check
    _
  $region3: #{transformer_forward.1} parent=0 // pred_check_branch
    %19 = sbr.rel (0) target = $region5
  $region4: #{transformer_forward.1} parent=0 // pred_region
    _
  $region5: #{transformer_forward.1} parent=0 // pred_fallthru
    _
  // Predicated region
  $region6: #{transformer_forward.1} parent=0 // pred_check
    _
  $region7: #{transformer_forward.1} parent=0 // pred_check_branch
    %21 = sbr.rel (0) target = $region9
  $region8: #{transformer_forward.1} parent=0 // pred_region
    _
  $region9: #{transformer_forward.1} parent=0 // pred_fallthru
    _
  // Predicated region
  $region10: #{transformer_forward.1} parent=0 // pred_check
    _
  $region11: #{transformer_forward.1} parent=0 // pred_check_branch
    %23 = sbr.rel (0) target = $region13
  $region12: #{transformer_forward.1} parent=0 // pred_region
    _
  $region13: #{transformer_forward.1} parent=0 // pred_fallthru
    _
  // Predicated region
  $region14: #{transformer_forward.1} parent=0 // pred_check
    _
  $region15: #{transformer_forward.1} parent=0 // pred_check_branch
    %25 = sbr.rel (0) target = $region17
  $region16: #{transformer_forward.1} parent=0 // pred_region
    _
  $region17: #{transformer_forward.1} parent=0 // pred_fallthru
    _
  // Predicated region
  $region18: #{transformer_forward.1} parent=0 // pred_check
    _
  $region19: #{transformer_forward.1} parent=0 // pred_check_branch
    %27 = sbr.rel (0) target = $region21
  $region20: #{transformer_forward.1} parent=0 // pred_region
    _
  $region21: #{transformer_forward.1} parent=0 // pred_fallthru
    _
  // Predicated region
  $region22: #{transformer_forward.1} parent=0 // pred_check
    _
  $region23: #{transformer_forward.1} parent=0 // pred_check_branch
    %29 = sbr.rel (0) target = $region25
  $region24: #{transformer_forward.1} parent=0 // pred_region
    _
  $region25: #{transformer_forward.1} parent=0 // pred_fallthru
    _
  // Predicated region
  $region26: #{transformer_forward.1} parent=0 // pred_check
    _
  $region27: #{transformer_forward.1} parent=0 // pred_check_branch
    %31 = sbr.rel (0) target = $region29
  $region28: #{transformer_forward.1} parent=0 // pred_region
    _
  $region29: #{transformer_forward.1} parent=0 // pred_fallthru
    _
  // Predicated region
  $region30: #{transformer_forward.1} parent=0 // pred_check
    _
  $region31: #{transformer_forward.1} parent=0 // pred_check_branch
    %33 = sbr.rel (0) target = $region33
  $region32: #{transformer_forward.1} parent=0 // pred_region
    _
  $region33: #{transformer_forward.1} parent=0 // pred_fallthru
    _
  // Predicated region
  $region34: #{transformer_forward.1} parent=0 // pred_check
    _
  $region35: #{transformer_forward.1} parent=0 // pred_check_branch
    %35 = sbr.rel (0) target = $region37
  $region36: #{transformer_forward.1} parent=0 // pred_region
    _
  $region37: #{transformer_forward.1} parent=0 // pred_fallthru
    _
  // Predicated region
  $region38: #{transformer_forward.1} parent=0 // pred_check
    _
  $region39: #{transformer_forward.1} parent=0 // pred_check_branch
    %37 = sbr.rel (0) target = $region41
  $region40: #{transformer_forward.1} parent=0 // pred_region
    _
  $region41: #{transformer_forward.1} parent=0 // pred_fallthru
    _
  // Predicated region
  $region42: #{transformer_forward.1} parent=0 // pred_check
    _
  $region43: #{transformer_forward.1} parent=0 // pred_check_branch
    %39 = sbr.rel (0) target = $region45
  $region44: #{transformer_forward.1} parent=0 // pred_region
    _
  $region45: #{transformer_forward.1} parent=0 // pred_fallthru
    _
  // Predicated region
  $region46: #{transformer_forward.1} parent=0 // pred_check
    _
  $region47: #{transformer_forward.1} parent=0 // pred_check_branch
    %41 = sbr.rel (0) target = $region49
  $region48: #{transformer_forward.1} parent=0 // pred_region
    _
  $region49: #{transformer_forward.1} parent=0 // pred_fallthru
    _
  // Predicated region
  $region50: #{transformer_forward.1} parent=0 // pred_check
    _
  $region51: #{transformer_forward.1} parent=0 // pred_check_branch
    %43 = sbr.rel (0) target = $region53
  $region52: #{transformer_forward.1} parent=0 // pred_region
    _
  $region53: #{transformer_forward.1} parent=0 // pred_fallthru
    _
  %v45 = vld [vmem:[%s0] sm:$0x3f]
  %v46 = vld [vmem:[%s0 + $0x8] sm:$0x3f]
  %v47 = vld [vmem:[%s1] sm:$0x3f]
  %v48 = vadd.f32 %v45, %v47
  %v49 = vadd.f32 %v46, %v47
  %v52 = vcombine.high %v48, %v48
  %v54 = vunpack.c.l.s4 1983009808
  %v55 = vunpack.c.0.s8 %v54
  %v56 = vlaneseq
  %v57 = vshrl.u32 %v56, 7
  %v58 = vsub.s32 %v55, %v57
  %v59 = vrot.slane %v48, %v58
  %v61 = vunpack.c.l.s4 1983009808
  %v62 = vunpack.c.0.s8 %v61
  %v63 = vlaneseq
  %v64 = vshrl.u32 %v63, 7
  %v65 = vsub.s32 %v62, %v64
  %v66 = vrot.slane %v52, %v65
  %v67 = vcombine.high %v59, %v59
  %v68 = vcombine.high %v49, %v49
  %v70 = vunpack.c.l.s4 1983009808
  %v71 = vunpack.c.0.s8 %v70
  %v72 = vlaneseq
  %v73 = vshrl.u32 %v72, 7
  %v74 = vsub.s32 %v71, %v73
  %v75 = vrot.slane %v49, %v74
  %v77 = vunpack.c.l.s4 1983009808
  %v78 = vunpack.c.0.s8 %v77
  %v79 = vlaneseq
  %v80 = vshrl.u32 %v79, 7
  %v81 = vsub.s32 %v78, %v80
  %v82 = vrot.slane %v68, %v81
  %v83 = vcombine.high %v75, %v75
  %v84 = vld [vmem:[%s2] sm:$0xff]
  %v85 = vld [vmem:[%s2 + $0x8] sm:$0xff]
  %v86 = vld [vmem:[%s2 + $0x10] sm:$0xff]
  %v87 = vld [vmem:[%s2 + $0x18] sm:$0xff]
  %v88 = vld [vmem:[%s2 + $0x20] sm:$0xff]
  %v89 = vld [vmem:[%s2 + $0x28] sm:$0xff]
  %v90 = vld [vmem:[%s5] sm:$0xf]
  %v91 = vld [vmem:[%s5 + $0x4] sm:$0xf]
  %v92 = vld [vmem:[%s5 + $0x8] sm:$0xf]
  %v93 = vld [vmem:[%s5 + $0xc] sm:$0xf]
  %v94 = vcombine.low %v59, %v67
  %v95 = vcombine.low %v66, %v75
  %v97 = vunpack.c.l.s4 1983009808
  %v98 = vunpack.c.0.s8 %v97
  %v99 = vlaneseq
  %v100 = vshrl.u32 %v99, 7
  %v101 = vsub.s32 %v98, %v100
  %v102 = vrot.slane %v94, %v101
  %v104 = vunpack.c.l.s4 1983009808
  %v105 = vunpack.c.0.s8 %v104
  %v106 = vlaneseq
  %v107 = vshrl.u32 %v106, 7
  %v108 = vsub.s32 %v105, %v107
  %v109 = vrot.slane %v95, %v108
  %v110 = vcombine.low %v102, %v109
  %v111 = vcombine.low %v83, %v82
  %v113 = vunpack.c.l.s4 1983009808
  %v114 = vunpack.c.0.s8 %v113
  %v115 = vlaneseq
  %v116 = vshrl.u32 %v115, 7
  %v117 = vsub.s32 %v114, %v116
  %v118 = vrot.slane %v111, %v117
  %v121 = vpack.c.bf16 %v118, %v110
  %v126 = vunpack.c.l.b16 %v90
  %v127 = vunpack.c.l.b16 %v91
  %v128 = vunpack.c.l.b16 %v92
  %v129 = vunpack.c.l.b16 %v93
  %v130 = vpack.c.b16 %v127, %v126
  %v131 = vpack.c.b16 %v129, %v128
  %vm132 = vcmask 261120
  %v134 = vsel %vm132, %v121, 0
  %v137 = vsel %vm132, %v130, 0
  %v140 = vsel %vm132, %v131, 0
  %142 = vmatprep.subr.bf16.mxu0 0
  %143 = vmatpush1.bf16.xpose.msra.mxu0 %v137
  %144 = vmatprep.subr.bf16.mxu0 0
  %145 = vmatpush1.bf16.xpose.msra.mxu0 %v140
  %146 = vmatprep.subr.bf16.mxu0 0
  %147 = vmatpush1.bf16.xpose.msra.mxu0 0
  %148 = vmatprep.subr.bf16.mxu0 0
  %149 = vmatpush1.bf16.xpose.msra.mxu0 0
  %150 = vmatprep.subr.bf16.mxu0 0
  %151 = vmatpush1.bf16.xpose.msra.mxu0 0
  %152 = vmatprep.subr.bf16.mxu0 0
  %153 = vmatpush1.bf16.xpose.msra.mxu0 0
  %154 = vmatprep.subr.bf16.mxu0 0
  %155 = vmatpush1.bf16.xpose.msra.mxu0 0
  %156 = vmatprep.subr.bf16.mxu0 0
  %157 = vmatpush1.bf16.xpose.msra.mxu0 0
  %158 = vmatprep.subr.bf16.mxu0 0
  %159 = vmatpush1.bf16.xpose.msra.mxu0 0
  %160 = vmatprep.subr.bf16.mxu0 0
  %161 = vmatpush1.bf16.xpose.msra.mxu0 0
  %162 = vmatprep.subr.bf16.mxu0 0
  %163 = vmatpush1.bf16.xpose.msra.mxu0 0
  %164 = vmatprep.subr.bf16.mxu0 0
  %165 = vmatpush1.bf16.xpose.msra.mxu0 0
  %166 = vmatprep.subr.bf16.mxu0 0
  %167 = vmatpush1.bf16.xpose.msra.mxu0 0
  %168 = vmatprep.subr.bf16.mxu0 0
  %169 = vmatpush1.bf16.xpose.msra.mxu0 0
  %170 = vmatprep.subr.bf16.mxu0 0
  %171 = vmatpush1.bf16.xpose.msra.mxu0 0
  %172 = vmatprep.subr.bf16.mxu0 0
  %173 = vmatpush1.bf16.xpose.msra.mxu0 0
  %174 = vmatprep.mubr.bf16.mxu0 0
  %175 = vmatmul.mubr.bf16.gmra.mrb[0].mxu0 %v134
  %v176 = vpop.f32.mrb[0].mxu0
  %v177 = vadd.f32 0.0, %v176
  %v178 = vpop.f32.mrb[0].mxu0
  %v179 = vpop.f32.mrb[0].mxu0
  %v180 = vadd.f32 0.0, %v179
  %v181 = vpop.f32.mrb[0].mxu0
  %182 = vdwg.mxu0
  %v183 = vmul.f32 %v177, 0.35355338
  %v184 = vmul.f32 %v180, 0.35355338
  %v185 = vld [vmem:[%s6] sm:$0xf]
  %v186 = vld [vmem:[%s6 + $0x4] sm:$0xf]
  %v187 = vld [vmem:[%s6 + $0x8] sm:$0xf]
  %v188 = vld [vmem:[%s6 + $0xc] sm:$0xf]
  %v193 = vunpack.c.l.b16 %v185
  %v194 = vunpack.c.l.b16 %v186
  %v195 = vunpack.c.l.b16 %v187
  %v196 = vunpack.c.l.b16 %v188
  %v197 = vpack.c.b16 %v194, %v193
  %v198 = vpack.c.b16 %v196, %v195
  %v200 = vsel %vm132, %v197, 0
  %v203 = vsel %vm132, %v198, 0
  %205 = vmatprep.subr.bf16.mxu0 0
  %206 = vmatpush1.bf16.xpose.msra.mxu0 %v200
  %207 = vmatprep.subr.bf16.mxu0 0
  %208 = vmatpush1.bf16.xpose.msra.mxu0 %v203
  %209 = vmatprep.subr.bf16.mxu0 0
  %210 = vmatpush1.bf16.xpose.msra.mxu0 0
  %211 = vmatprep.subr.bf16.mxu0 0
  %212 = vmatpush1.bf16.xpose.msra.mxu0 0
  %213 = vmatprep.subr.bf16.mxu0 0
  %214 = vmatpush1.bf16.xpose.msra.mxu0 0
  %215 = vmatprep.subr.bf16.mxu0 0
  %216 = vmatpush1.bf16.xpose.msra.mxu0 0
  %217 = vmatprep.subr.bf16.mxu0 0
  %218 = vmatpush1.bf16.xpose.msra.mxu0 0
  %219 = vmatprep.subr.bf16.mxu0 0
  %220 = vmatpush1.bf16.xpose.msra.mxu0 0
  %221 = vmatprep.subr.bf16.mxu0 0
  %222 = vmatpush1.bf16.xpose.msra.mxu0 0
  %223 = vmatprep.subr.bf16.mxu0 0
  %224 = vmatpush1.bf16.xpose.msra.mxu0 0
  %225 = vmatprep.subr.bf16.mxu0 0
  %226 = vmatpush1.bf16.xpose.msra.mxu0 0
  %227 = vmatprep.subr.bf16.mxu0 0
  %228 = vmatpush1.bf16.xpose.msra.mxu0 0
  %229 = vmatprep.subr.bf16.mxu0 0
  %230 = vmatpush1.bf16.xpose.msra.mxu0 0
  %231 = vmatprep.subr.bf16.mxu0 0
  %232 = vmatpush1.bf16.xpose.msra.mxu0 0
  %233 = vmatprep.subr.bf16.mxu0 0
  %234 = vmatpush1.bf16.xpose.msra.mxu0 0
  %235 = vmatprep.subr.bf16.mxu0 0
  %236 = vmatpush1.bf16.xpose.msra.mxu0 0
  %237 = vmatprep.mubr.bf16.mxu0 0
  %238 = vmatmul.mubr.bf16.gmra.mrb[0].mxu0 %v134
  %v239 = vpop.f32.mrb[0].mxu0
  %v240 = vadd.f32 0.0, %v239
  %v241 = vpop.f32.mrb[0].mxu0
  %v242 = vpop.f32.mrb[0].mxu0
  %v243 = vadd.f32 0.0, %v242
  %v244 = vpop.f32.mrb[0].mxu0
  %245 = vdwg.mxu0
  %v246 = vld [vmem:[%s7] sm:$0xf]
  %v247 = vld [vmem:[%s7 + $0x4] sm:$0xf]
  %v248 = vld [vmem:[%s7 + $0x8] sm:$0xf]
  %v249 = vld [vmem:[%s7 + $0xc] sm:$0xf]
  %v254 = vunpack.c.l.b16 %v246
  %v255 = vunpack.c.l.b16 %v247
  %v256 = vunpack.c.l.b16 %v248
  %v257 = vunpack.c.l.b16 %v249
  %v258 = vpack.c.b16 %v255, %v254
  %v259 = vpack.c.b16 %v257, %v256
  %v261 = vsel %vm132, %v258, 0
  %v264 = vsel %vm132, %v259, 0
  %266 = vmatprep.subr.bf16.mxu0 0
  %267 = vmatpush1.bf16.xpose.msra.mxu0 %v261
  %268 = vmatprep.subr.bf16.mxu0 0
  %269 = vmatpush1.bf16.xpose.msra.mxu0 %v264
  %270 = vmatprep.subr.bf16.mxu0 0
  %271 = vmatpush1.bf16.xpose.msra.mxu0 0
  %272 = vmatprep.subr.bf16.mxu0 0
  %273 = vmatpush1.bf16.xpose.msra.mxu0 0
  %274 = vmatprep.subr.bf16.mxu0 0
  %275 = vmatpush1.bf16.xpose.msra.mxu0 0
  %276 = vmatprep.subr.bf16.mxu0 0
  %277 = vmatpush1.bf16.xpose.msra.mxu0 0
  %278 = vmatprep.subr.bf16.mxu0 0
  %279 = vmatpush1.bf16.xpose.msra.mxu0 0
  %280 = vmatprep.subr.bf16.mxu0 0
  %281 = vmatpush1.bf16.xpose.msra.mxu0 0
  %282 = vmatprep.subr.bf16.mxu0 0
  %283 = vmatpush1.bf16.xpose.msra.mxu0 0
  %284 = vmatprep.subr.bf16.mxu0 0
  %285 = vmatpush1.bf16.xpose.msra.mxu0 0
  %286 = vmatprep.subr.bf16.mxu0 0
  %287 = vmatpush1.bf16.xpose.msra.mxu0 0
  %288 = vmatprep.subr.bf16.mxu0 0
  %289 = vmatpush1.bf16.xpose.msra.mxu0 0
  %290 = vmatprep.subr.bf16.mxu0 0
  %291 = vmatpush1.bf16.xpose.msra.mxu0 0
  %292 = vmatprep.subr.bf16.mxu0 0
  %293 = vmatpush1.bf16.xpose.msra.mxu0 0
  %294 = vmatprep.subr.bf16.mxu0 0
  %295 = vmatpush1.bf16.xpose.msra.mxu0 0
  %296 = vmatprep.subr.bf16.mxu0 0
  %297 = vmatpush1.bf16.xpose.msra.mxu0 0
  %298 = vmatprep.mubr.bf16.mxu0 0
  %299 = vmatmul.mubr.bf16.gmra.mrb[0].mxu0 %v134
  %v300 = vpop.f32.mrb[0].mxu0
  %v301 = vadd.f32 0.0, %v300
  %v302 = vpop.f32.mrb[0].mxu0
  %v303 = vpop.f32.mrb[0].mxu0
  %v304 = vadd.f32 0.0, %v303
  %v305 = vpop.f32.mrb[0].mxu0
  %306 = vdwg.mxu0
  %vm309 = vcmask 1043456
  %v310 = vrot.slane %v183, 4
  %v311 = vrot.slane %v184, 4
  %v312 = vsel %vm309, %v310, %v311
  %313 = vrot.lane.b32.xlu0 %v310, 120
  %v314 = vpop.permute.xlu0 %313
  %315 = vrot.lane.b32.xlu0 %v312, 120
  %v316 = vpop.permute.xlu0 %315
  %319 = vrot.lane.b32.xlu0 %v183, 112
  %v320 = vpop.permute.xlu0 %319
  %321 = vrot.lane.b32.xlu0 %v184, 112
  %v322 = vpop.permute.xlu0 %321
  %325 = vrot.lane.b32.xlu0 %v310, 104
  %v326 = vpop.permute.xlu0 %325
  %327 = vrot.lane.b32.xlu0 %v312, 104
  %v328 = vpop.permute.xlu0 %327
  %v331 = vsel %vm309, %v184, %v314
  %v332 = vsel %vm309, %v322, %v326
  %v335 = vrot.slane %v240, 4
  %v336 = vrot.slane %v243, 4
  %v337 = vsel %vm309, %v335, %v336
  %338 = vrot.lane.b32.xlu0 %v335, 120
  %v339 = vpop.permute.xlu0 %338
  %340 = vrot.lane.b32.xlu0 %v337, 120
  %v341 = vpop.permute.xlu0 %340
  %344 = vrot.lane.b32.xlu0 %v240, 112
  %v345 = vpop.permute.xlu0 %344
  %346 = vrot.lane.b32.xlu0 %v243, 112
  %v347 = vpop.permute.xlu0 %346
  %350 = vrot.lane.b32.xlu0 %v335, 104
  %v351 = vpop.permute.xlu0 %350
  %352 = vrot.lane.b32.xlu0 %v337, 104
  %v353 = vpop.permute.xlu0 %352
  %v356 = vsel %vm309, %v243, %v339
  %v357 = vsel %vm309, %v347, %v351
  %v360 = vrot.slane %v301, 4
  %v361 = vrot.slane %v304, 4
  %v362 = vsel %vm309, %v360, %v361
  %363 = vrot.lane.b32.xlu0 %v360, 120
  %v364 = vpop.permute.xlu0 %363
  %365 = vrot.lane.b32.xlu0 %v362, 120
  %v366 = vpop.permute.xlu0 %365
  %369 = vrot.lane.b32.xlu0 %v301, 112
  %v370 = vpop.permute.xlu0 %369
  %371 = vrot.lane.b32.xlu0 %v304, 112
  %v372 = vpop.permute.xlu0 %371
  %375 = vrot.lane.b32.xlu0 %v360, 104
  %v376 = vpop.permute.xlu0 %375
  %377 = vrot.lane.b32.xlu0 %v362, 104
  %v378 = vpop.permute.xlu0 %377
  %v381 = vsel %vm309, %v304, %v364
  %v382 = vsel %vm309, %v372, %v376
  %v383 = vpack.c.bf16 %v331, %v183
  %v384 = vpack.c.bf16 %v320, %v316
  %v385 = vpack.c.bf16 %v328, %v332
  %v386 = vpack.c.bf16 %v356, %v240
  %v387 = vpack.c.bf16 %v345, %v341
  %v388 = vpack.c.bf16 %v353, %v357
  %vm389 = vcmask 64512
  %v391 = vsel %vm389, %v383, 0
  %v394 = vsel %vm389, %v384, 0
  %v397 = vsel %vm389, %v385, 0
  %v400 = vsel %vm389, %v386, 0
  %v403 = vsel %vm389, %v387, 0
  %v406 = vsel %vm389, %v388, 0
  %408 = vmatprep.subr.bf16.mxu0 0
  %409 = vmatpush1.bf16.xpose.msra.mxu0 %v400
  %410 = vmatprep.subr.bf16.mxu0 0
  %411 = vmatpush1.bf16.xpose.msra.mxu0 %v403
  %412 = vmatprep.subr.bf16.mxu0 0
  %413 = vmatpush1.bf16.xpose.msra.mxu0 %v406
  %414 = vmatprep.subr.bf16.mxu0 0
  %415 = vmatpush1.bf16.xpose.msra.mxu0 0
  %416 = vmatprep.subr.bf16.mxu0 0
  %417 = vmatpush1.bf16.xpose.msra.mxu0 0
  %418 = vmatprep.subr.bf16.mxu0 0
  %419 = vmatpush1.bf16.xpose.msra.mxu0 0
  %420 = vmatprep.subr.bf16.mxu0 0
  %421 = vmatpush1.bf16.xpose.msra.mxu0 0
  %422 = vmatprep.subr.bf16.mxu0 0
  %423 = vmatpush1.bf16.xpose.msra.mxu0 0
  %424 = vmatprep.subr.bf16.mxu0 0
  %425 = vmatpush1.bf16.xpose.msra.mxu0 0
  %426 = vmatprep.subr.bf16.mxu0 0
  %427 = vmatpush1.bf16.xpose.msra.mxu0 0
  %428 = vmatprep.subr.bf16.mxu0 0
  %429 = vmatpush1.bf16.xpose.msra.mxu0 0
  %430 = vmatprep.subr.bf16.mxu0 0
  %431 = vmatpush1.bf16.xpose.msra.mxu0 0
  %432 = vmatprep.subr.bf16.mxu0 0
  %433 = vmatpush1.bf16.xpose.msra.mxu0 0
  %434 = vmatprep.subr.bf16.mxu0 0
  %435 = vmatpush1.bf16.xpose.msra.mxu0 0
  %436 = vmatprep.subr.bf16.mxu0 0
  %437 = vmatpush1.bf16.xpose.msra.mxu0 0
  %438 = vmatprep.subr.bf16.mxu0 0
  %439 = vmatpush1.bf16.xpose.msra.mxu0 0
  %440 = vmatprep.mubr.bf16.mxu0 0
  %441 = vmatmul.mubr.bf16.gmra.mrb[0].mxu0 %v391
  %v442 = vpop.f32.mrb[0].mxu0
  %v443 = vadd.f32 %v84, %v442
  %v444 = vpop.f32.mrb[0].mxu0
  %v445 = vpop.f32.mrb[0].mxu0
  %v446 = vadd.f32 %v85, %v445
  %v447 = vpop.f32.mrb[0].mxu0
  %448 = vmatprep.mubr.bf16.mxu0 0
  %449 = vmatmul.mubr.bf16.gmra.mrb[0].mxu0 %v394
  %v450 = vpop.f32.mrb[0].mxu0
  %v451 = vadd.f32 %v86, %v450
  %v452 = vpop.f32.mrb[0].mxu0
  %v453 = vpop.f32.mrb[0].mxu0
  %v454 = vadd.f32 %v87, %v453
  %v455 = vpop.f32.mrb[0].mxu0
  %456 = vmatprep.mubr.bf16.mxu0 0
  %457 = vmatmul.mubr.bf16.gmra.mrb[0].mxu0 %v397
  %v458 = vpop.f32.mrb[0].mxu0
  %v459 = vadd.f32 %v88, %v458
  %v460 = vpop.f32.mrb[0].mxu0
  %v461 = vpop.f32.mrb[0].mxu0
  %v462 = vadd.f32 %v89, %v461
  %v463 = vpop.f32.mrb[0].mxu0
  %464 = vdwg.mxu0
  %vm465 = vcmask 392192
  %v466 = vsel %vm465, %v443, -inf
  %467 = vmax.xlane.f32.xlu0 %v466
  %v468 = vpop.xlane.xlu0 %467
  %v469 = vsel %vm465, %v446, -inf
  %470 = vmax.xlane.f32.xlu0 %v469
  %v471 = vpop.xlane.xlu0 %470
  %v472 = vsel %vm465, %v451, -inf
  %473 = vmax.xlane.f32.xlu0 %v472
  %v474 = vpop.xlane.xlu0 %473
  %v475 = vsel %vm465, %v454, -inf
  %476 = vmax.xlane.f32.xlu0 %v475
  %v477 = vpop.xlane.xlu0 %476
  %v478 = vsel %vm465, %v459, -inf
  %479 = vmax.xlane.f32.xlu0 %v478
  %v480 = vpop.xlane.xlu0 %479
  %v481 = vsel %vm465, %v462, -inf
  %482 = vmax.xlane.f32.xlu0 %v481
  %v483 = vpop.xlane.xlu0 %482
  %v484 = vsub.f32 %v443, %v468
  %v485 = vsub.f32 %v446, %v471
  %v486 = vsub.f32 %v451, %v474
  %v487 = vsub.f32 %v454, %v477
  %v488 = vsub.f32 %v459, %v480
  %v489 = vsub.f32 %v462, %v483
  %v490 = vmul.f32 %v484, 1.442695
  %v491 = vpow.pop %v490
  %v492 = vmul.f32 %v485, 1.442695
  %v493 = vpow.pop %v492
  %v494 = vmul.f32 %v486, 1.442695
  %v495 = vpow.pop %v494
  %v496 = vmul.f32 %v487, 1.442695
  %v497 = vpow.pop %v496
  %v498 = vmul.f32 %v488, 1.442695
  %v499 = vpow.pop %v498
  %v500 = vmul.f32 %v489, 1.442695
  %v501 = vpow.pop %v500
  %v502 = vsel %vm465, %v491, 0.0
  %503 = vadd.xlane.f32.xlu0 %v502
  %v504 = vpop.xlane.xlu0 %503
  %v505 = vsel %vm465, %v493, 0.0
  %506 = vadd.xlane.f32.xlu0 %v505
  %v507 = vpop.xlane.xlu0 %506
  %v508 = vsel %vm465, %v495, 0.0
  %509 = vadd.xlane.f32.xlu0 %v508
  %v510 = vpop.xlane.xlu0 %509
  %v511 = vsel %vm465, %v497, 0.0
  %512 = vadd.xlane.f32.xlu0 %v511
  %v513 = vpop.xlane.xlu0 %512
  %v514 = vsel %vm465, %v499, 0.0
  %515 = vadd.xlane.f32.xlu0 %v514
  %v516 = vpop.xlane.xlu0 %515
  %v517 = vsel %vm465, %v501, 0.0
  %518 = vadd.xlane.f32.xlu0 %v517
  %v519 = vpop.xlane.xlu0 %518
  %v520 = vrcp.pop %v504
  %v521 = vrcp.pop %v507
  %v522 = vrcp.pop %v510
  %v523 = vrcp.pop %v513
  %v524 = vrcp.pop %v516
  %v525 = vrcp.pop %v519
  %v526 = vmul.f32 %v491, %v520
  %v527 = vmul.f32 %v493, %v521
  %v528 = vmul.f32 %v495, %v522
  %v529 = vmul.f32 %v497, %v523
  %v530 = vmul.f32 %v499, %v524
  %v531 = vmul.f32 %v501, %v525
  %v532 = vpack.c.bf16 %v527, %v526
  %v533 = vpack.c.bf16 %v529, %v528
  %v534 = vpack.c.bf16 %v531, %v530
  %v535 = vpack.c.bf16 %v381, %v301
  %v536 = vpack.c.bf16 %v370, %v366
  %v537 = vpack.c.bf16 %v378, %v382
  %v539 = vsel %vm465, %v532, 0
  %v542 = vsel %vm465, %v533, 0
  %v545 = vsel %vm465, %v534, 0
  %547 = vmatprep.subr.bf16.mxu0 0
  %548 = vmatpush1.bf16.msra.mxu0 %v535
  %549 = vmatprep.subr.bf16.mxu0 0
  %550 = vmatpush1.bf16.msra.mxu0 %v536
  %551 = vmatprep.subr.bf16.mxu0 0
  %552 = vmatpush1.bf16.msra.mxu0 %v537
  %553 = vmatprep.subr.bf16.mxu0 0
  %554 = vmatpush1.bf16.msra.mxu0 0
  %555 = vmatprep.subr.bf16.mxu0 0
  %556 = vmatpush1.bf16.msra.mxu0 0
  %557 = vmatprep.subr.bf16.mxu0 0
  %558 = vmatpush1.bf16.msra.mxu0 0
  %559 = vmatprep.subr.bf16.mxu0 0
  %560 = vmatpush1.bf16.msra.mxu0 0
  %561 = vmatprep.subr.bf16.mxu0 0
  %562 = vmatpush1.bf16.msra.mxu0 0
  %563 = vmatprep.subr.bf16.mxu0 0
  %564 = vmatpush1.bf16.msra.mxu0 0
  %565 = vmatprep.subr.bf16.mxu0 0
  %566 = vmatpush1.bf16.msra.mxu0 0
  %567 = vmatprep.subr.bf16.mxu0 0
  %568 = vmatpush1.bf16.msra.mxu0 0
  %569 = vmatprep.subr.bf16.mxu0 0
  %570 = vmatpush1.bf16.msra.mxu0 0
  %571 = vmatprep.subr.bf16.mxu0 0
  %572 = vmatpush1.bf16.msra.mxu0 0
  %573 = vmatprep.subr.bf16.mxu0 0
  %574 = vmatpush1.bf16.msra.mxu0 0
  %575 = vmatprep.subr.bf16.mxu0 0
  %576 = vmatpush1.bf16.msra.mxu0 0
  %577 = vmatprep.subr.bf16.mxu0 0
  %578 = vmatpush1.bf16.msra.mxu0 0
  %579 = vmatprep.mubr.bf16.mxu0 0
  %580 = vmatmul.mubr.bf16.gmra.mrb[0].mxu0 %v539
  %v581 = vpop.f32.mrb[0].mxu0
  %v582 = vadd.f32 0.0, %v581
  %v583 = vpop.f32.mrb[0].mxu0
  %v584 = vpop.f32.mrb[0].mxu0
  %v585 = vadd.f32 0.0, %v584
  %v586 = vpop.f32.mrb[0].mxu0
  %587 = vmatprep.mubr.bf16.mxu0 0
  %588 = vmatmul.mubr.bf16.gmra.mrb[0].mxu0 %v542
  %v589 = vpop.f32.mrb[0].mxu0
  %v590 = vadd.f32 0.0, %v589
  %v591 = vpop.f32.mrb[0].mxu0
  %v592 = vpop.f32.mrb[0].mxu0
  %v593 = vadd.f32 0.0, %v592
  %v594 = vpop.f32.mrb[0].mxu0
  %595 = vmatprep.mubr.bf16.mxu0 0
  %596 = vmatmul.mubr.bf16.gmra.mrb[0].mxu0 %v545
  %v597 = vpop.f32.mrb[0].mxu0
  %v598 = vadd.f32 0.0, %v597
  %v599 = vpop.f32.mrb[0].mxu0
  %v600 = vpop.f32.mrb[0].mxu0
  %v601 = vadd.f32 0.0, %v600
  %v602 = vpop.f32.mrb[0].mxu0
  %603 = vdwg.mxu0
  %v606 = vrot.slane %v585, 4
  %v607 = vrot.slane %v590, 4
  %v608 = vsel %vm309, %v606, %v607
  %609 = vrot.lane.b32.xlu0 %v608, 8
  %v610 = vpop.permute.xlu0 %609
  %611 = vrot.lane.b32.xlu0 %v607, 8
  %v612 = vpop.permute.xlu0 %611
  %617 = vrot.lane.b32.xlu0 %v593, 16
  %v618 = vpop.permute.xlu0 %617
  %619 = vrot.lane.b32.xlu0 %v598, 16
  %v620 = vpop.permute.xlu0 %619
  %v624 = vrot.slane %v598, 4
  %v625 = vrot.slane %v601, 4
  %v626 = vsel %vm309, %v624, %v625
  %627 = vrot.lane.b32.xlu0 %v626, 24
  %v628 = vpop.permute.xlu0 %627
  %629 = vrot.lane.b32.xlu0 %v625, 24
  %v630 = vpop.permute.xlu0 %629
  %v633 = vsel %vm389, %v582, %v610
  %v634 = vsel %vm389, %v585, %v612
  %vm635 = vcmask 130048
  %v636 = vsel %vm635, %v633, %v618
  %v637 = vsel %vm635, %v634, %v620
  %vm638 = vcmask 195584
  %v639 = vsel %vm638, %v636, %v628
  %v640 = vsel %vm638, %v637, %v630
  %v641 = vld [vmem:[%s8] sm:$0x1]
  %v642 = vld [vmem:[%s9] sm:$0x1]
  %v643 = vsel %vm132, %v639, 0.0
  %644 = vadd.xlane.f32.xlu0 %v643
  %v645 = vpop.xlane.xlu0 %644
  %vm646 = vcmask 257024
  %v647 = vsel %vm646, %v640, 0.0
  %648 = vadd.xlane.f32.xlu0 %v647
  %v649 = vpop.xlane.xlu0 %648
  %v650 = vrcp.pop 32.0
  %v651 = vmul.f32 %v645, %v650
  %v652 = vmul.f32 %v649, %v650
  %v653 = vsub.f32 %v639, %v651
  %v654 = vsub.f32 %v640, %v652
  %v655 = vmul.f32 %v653, %v653
  %v656 = vmul.f32 %v654, %v654
  %v657 = vsel %vm132, %v655, 0.0
  %658 = vadd.xlane.f32.xlu0 %v657
  %v659 = vpop.xlane.xlu0 %658
  %v660 = vsel %vm646, %v656, 0.0
  %661 = vadd.xlane.f32.xlu0 %v660
  %v662 = vpop.xlane.xlu0 %661
  %v663 = vmul.f32 %v659, %v650
  %v664 = vmul.f32 %v662, %v650
  %v665 = vadd.f32 %v663, 1e-05
  %v666 = vadd.f32 %v664, 1e-05
  %v667 = vrsqrt.pop %v665
  %v668 = vrsqrt.pop %v666
  %v669 = vmul.f32 %v653, %v667
  %v670 = vmul.f32 %v654, %v668
  %v672 = vlaneseq
  %v673 = vshrl.u32 %v672, 7
  %v674 = vsub.s32 0, %v673
  %v675 = vrot.slane %v641, %v674
  %v677 = vmul.f32 %v669, %v675
  %v678 = vmul.f32 %v670, %v675
  %v680 = vlaneseq
  %v681 = vshrl.u32 %v680, 7
  %v682 = vsub.s32 0, %v681
  %v683 = vrot.slane %v642, %v682
  %v685 = vadd.f32 %v677, %v683
  %v686 = vadd.f32 %v678, %v683
  %v687 = vld [vmem:[%s10] sm:$0xf]
  %v688 = vld [vmem:[%s10 + $0x4] sm:$0xf]
  %v689 = vld [vmem:[%s10 + $0x8] sm:$0xf]
  %v690 = vld [vmem:[%s10 + $0xc] sm:$0xf]
  %v691 = vld [vmem:[%s10 + $0x10] sm:$0xf]
  %v692 = vld [vmem:[%s10 + $0x14] sm:$0xf]
  %v693 = vld [vmem:[%s10 + $0x18] sm:$0xf]
  %v694 = vld [vmem:[%s10 + $0x1c] sm:$0xf]
  %v695 = vld [vmem:[%s10 + $0x20] sm:$0xf]
  %v696 = vld [vmem:[%s10 + $0x24] sm:$0xf]
  %v697 = vld [vmem:[%s10 + $0x28] sm:$0xf]
  %v698 = vld [vmem:[%s10 + $0x2c] sm:$0xf]
  %v699 = vld [vmem:[%s10 + $0x30] sm:$0xf]
  %v700 = vld [vmem:[%s10 + $0x34] sm:$0xf]
  %v701 = vld [vmem:[%s10 + $0x38] sm:$0xf]
  %v702 = vld [vmem:[%s10 + $0x3c] sm:$0xf]
  %v703 = vpack.c.bf16 %v686, %v685
  %v720 = vunpack.c.l.b16 %v687
  %v721 = vunpack.c.l.b16 %v688
  %v722 = vunpack.c.l.b16 %v689
  %v723 = vunpack.c.l.b16 %v690
  %v724 = vunpack.c.l.b16 %v691
  %v725 = vunpack.c.l.b16 %v692
  %v726 = vunpack.c.l.b16 %v693
  %v727 = vunpack.c.l.b16 %v694
  %v728 = vunpack.c.l.b16 %v695
  %v729 = vunpack.c.l.b16 %v696
  %v730 = vunpack.c.l.b16 %v697
  %v731 = vunpack.c.l.b16 %v698
  %v732 = vunpack.c.l.b16 %v699
  %v733 = vunpack.c.l.b16 %v700
  %v734 = vunpack.c.l.b16 %v701
  %v735 = vunpack.c.l.b16 %v702
  %v736 = vpack.c.b16 %v721, %v720
  %v737 = vpack.c.b16 %v723, %v722
  %v738 = vpack.c.b16 %v725, %v724
  %v739 = vpack.c.b16 %v727, %v726
  %v740 = vpack.c.b16 %v729, %v728
  %v741 = vpack.c.b16 %v731, %v730
  %v742 = vpack.c.b16 %v733, %v732
  %v743 = vpack.c.b16 %v735, %v734
  %v745 = vsel %vm132, %v703, 0
  %v748 = vsel %vm132, %v736, 0
  %v751 = vsel %vm132, %v737, 0
  %v754 = vsel %vm132, %v738, 0
  %v757 = vsel %vm132, %v739, 0
  %v760 = vsel %vm132, %v740, 0
  %v763 = vsel %vm132, %v741, 0
  %v766 = vsel %vm132, %v742, 0
  %v769 = vsel %vm132, %v743, 0
  %771 = vmatprep.subr.bf16.mxu0 0
  %772 = vmatpush1.bf16.xpose.msra.mxu0 %v748
  %773 = vmatprep.subr.bf16.mxu0 0
  %774 = vmatpush1.bf16.xpose.msra.mxu0 %v751
  %775 = vmatprep.subr.bf16.mxu0 0
  %776 = vmatpush1.bf16.xpose.msra.mxu0 %v754
  %777 = vmatprep.subr.bf16.mxu0 0
  %778 = vmatpush1.bf16.xpose.msra.mxu0 %v757
  %779 = vmatprep.subr.bf16.mxu0 0
  %780 = vmatpush1.bf16.xpose.msra.mxu0 %v760
  %781 = vmatprep.subr.bf16.mxu0 0
  %782 = vmatpush1.bf16.xpose.msra.mxu0 %v763
  %783 = vmatprep.subr.bf16.mxu0 0
  %784 = vmatpush1.bf16.xpose.msra.mxu0 %v766
  %785 = vmatprep.subr.bf16.mxu0 0
  %786 = vmatpush1.bf16.xpose.msra.mxu0 %v769
  %787 = vmatprep.subr.bf16.mxu0 0
  %788 = vmatpush1.bf16.xpose.msra.mxu0 0
  %789 = vmatprep.subr.bf16.mxu0 0
  %790 = vmatpush1.bf16.xpose.msra.mxu0 0
  %791 = vmatprep.subr.bf16.mxu0 0
  %792 = vmatpush1.bf16.xpose.msra.mxu0 0
  %793 = vmatprep.subr.bf16.mxu0 0
  %794 = vmatpush1.bf16.xpose.msra.mxu0 0
  %795 = vmatprep.subr.bf16.mxu0 0
  %796 = vmatpush1.bf16.xpose.msra.mxu0 0
  %797 = vmatprep.subr.bf16.mxu0 0
  %798 = vmatpush1.bf16.xpose.msra.mxu0 0
  %799 = vmatprep.subr.bf16.mxu0 0
  %800 = vmatpush1.bf16.xpose.msra.mxu0 0
  %801 = vmatprep.subr.bf16.mxu0 0
  %802 = vmatpush1.bf16.xpose.msra.mxu0 0
  %803 = vmatprep.mubr.bf16.mxu0 0
  %804 = vmatmul.mubr.bf16.gmra.mrb[0].mxu0 %v745
  %v805 = vpop.f32.mrb[0].mxu0
  %v806 = vadd.f32 0.0, %v805
  %v807 = vpop.f32.mrb[0].mxu0
  %v808 = vpop.f32.mrb[0].mxu0
  %v809 = vadd.f32 0.0, %v808
  %v810 = vpop.f32.mrb[0].mxu0
  %811 = vdwg.mxu0
  %v812 = vmax.f32 %v806, 0.0
  %v813 = vmax.f32 %v809, 0.0
  %v814 = vld [vmem:[%s11] sm:$0xf]
  %v815 = vld [vmem:[%s11 + $0x4] sm:$0xf]
  %v816 = vld [vmem:[%s11 + $0x8] sm:$0xf]
  %v817 = vld [vmem:[%s11 + $0xc] sm:$0xf]
  %v818 = vpack.c.bf16 %v813, %v812
  %v823 = vunpack.c.l.b16 %v814
  %v824 = vunpack.c.l.b16 %v815
  %v825 = vunpack.c.l.b16 %v816
  %v826 = vunpack.c.l.b16 %v817
  %v827 = vpack.c.b16 %v824, %v823
  %v828 = vpack.c.b16 %v826, %v825
  %831 = vmatprep.subr.bf16.mxu0 0
  %832 = vmatpush1.bf16.xpose.msra.mxu0 %v827
  %833 = vmatprep.subr.bf16.mxu0 0
  %834 = vmatpush1.bf16.xpose.msra.mxu0 %v828
  %835 = vmatprep.subr.bf16.mxu0 0
  %836 = vmatpush1.bf16.xpose.msra.mxu0 0
  %837 = vmatprep.subr.bf16.mxu0 0
  %838 = vmatpush1.bf16.xpose.msra.mxu0 0
  %839 = vmatprep.subr.bf16.mxu0 0
  %840 = vmatpush1.bf16.xpose.msra.mxu0 0
  %841 = vmatprep.subr.bf16.mxu0 0
  %842 = vmatpush1.bf16.xpose.msra.mxu0 0
  %843 = vmatprep.subr.bf16.mxu0 0
  %844 = vmatpush1.bf16.xpose.msra.mxu0 0
  %845 = vmatprep.subr.bf16.mxu0 0
  %846 = vmatpush1.bf16.xpose.msra.mxu0 0
  %847 = vmatprep.subr.bf16.mxu0 0
  %848 = vmatpush1.bf16.xpose.msra.mxu0 0
  %849 = vmatprep.subr.bf16.mxu0 0
  %850 = vmatpush1.bf16.xpose.msra.mxu0 0
  %851 = vmatprep.subr.bf16.mxu0 0
  %852 = vmatpush1.bf16.xpose.msra.mxu0 0
  %853 = vmatprep.subr.bf16.mxu0 0
  %854 = vmatpush1.bf16.xpose.msra.mxu0 0
  %855 = vmatprep.subr.bf16.mxu0 0
  %856 = vmatpush1.bf16.xpose.msra.mxu0 0
  %857 = vmatprep.subr.bf16.mxu0 0
  %858 = vmatpush1.bf16.xpose.msra.mxu0 0
  %859 = vmatprep.subr.bf16.mxu0 0
  %860 = vmatpush1.bf16.xpose.msra.mxu0 0
  %861 = vmatprep.subr.bf16.mxu0 0
  %862 = vmatpush1.bf16.xpose.msra.mxu0 0
  %863 = vmatprep.mubr.bf16.mxu0 0
  %864 = vmatmul.mubr.bf16.gmra.mrb[0].mxu0 %v818
  %v865 = vpop.f32.mrb[0].mxu0
  %v866 = vadd.f32 %v110, %v865
  %v867 = vpop.f32.mrb[0].mxu0
  %v868 = vpop.f32.mrb[0].mxu0
  %v869 = vadd.f32 %v118, %v868
  %v870 = vpop.f32.mrb[0].mxu0
  %871 = vdwg.mxu0
  %s872 = scalar_lea.vmem %s3, 1
  %v873 = vld [vmem:[%s872] sm:$0x1]
  %s874 = scalar_lea.vmem %s4, 1
  %v875 = vld [vmem:[%s874] sm:$0x1]
  %v876 = vsel %vm132, %v866, 0.0
  %877 = vadd.xlane.f32.xlu0 %v876
  %v878 = vpop.xlane.xlu0 %877
  %v879 = vsel %vm646, %v869, 0.0
  %880 = vadd.xlane.f32.xlu0 %v879
  %v881 = vpop.xlane.xlu0 %880
  %v882 = vmul.f32 %v878, %v650
  %v883 = vmul.f32 %v881, %v650
  %v884 = vsub.f32 %v866, %v882
  %v885 = vsub.f32 %v869, %v883
  %v886 = vmul.f32 %v884, %v884
  %v887 = vmul.f32 %v885, %v885
  %v888 = vsel %vm132, %v886, 0.0
  %889 = vadd.xlane.f32.xlu0 %v888
  %v890 = vpop.xlane.xlu0 %889
  %v891 = vsel %vm646, %v887, 0.0
  %892 = vadd.xlane.f32.xlu0 %v891
  %v893 = vpop.xlane.xlu0 %892
  %v894 = vmul.f32 %v890, %v650
  %v895 = vmul.f32 %v893, %v650
  %v896 = vadd.f32 %v894, 1e-05
  %v897 = vadd.f32 %v895, 1e-05
  %v898 = vrsqrt.pop %v896
  %v899 = vrsqrt.pop %v897
  %v900 = vmul.f32 %v884, %v898
  %v901 = vmul.f32 %v885, %v899
  %v903 = vlaneseq
  %v904 = vshrl.u32 %v903, 7
  %v905 = vsub.s32 0, %v904
  %v906 = vrot.slane %v873, %v905
  %v908 = vmul.f32 %v900, %v906
  %v909 = vmul.f32 %v901, %v906
  %v911 = vlaneseq
  %v912 = vshrl.u32 %v911, 7
  %v913 = vsub.s32 0, %v912
  %v914 = vrot.slane %v875, %v913
  %v916 = vadd.f32 %v908, %v914
  %v917 = vadd.f32 %v909, %v914
  %s918 = scalar_lea.vmem %s5, 16
  %v919 = vld [vmem:[%s918] sm:$0xf]
  %v920 = vld [vmem:[%s918 + $0x4] sm:$0xf]
  %v921 = vld [vmem:[%s918 + $0x8] sm:$0xf]
  %v922 = vld [vmem:[%s918 + $0xc] sm:$0xf]
  %v923 = vpack.c.bf16 %v917, %v916
  %v928 = vunpack.c.l.b16 %v919
  %v929 = vunpack.c.l.b16 %v920
  %v930 = vunpack.c.l.b16 %v921
  %v931 = vunpack.c.l.b16 %v922
  %v932 = vpack.c.b16 %v929, %v928
  %v933 = vpack.c.b16 %v931, %v930
  %v935 = vsel %vm132, %v923, 0
  %v938 = vsel %vm132, %v932, 0
  %v941 = vsel %vm132, %v933, 0
  %943 = vmatprep.subr.bf16.mxu0 0
  %944 = vmatpush1.bf16.xpose.msra.mxu0 %v938
  %945 = vmatprep.subr.bf16.mxu0 0
  %946 = vmatpush1.bf16.xpose.msra.mxu0 %v941
  %947 = vmatprep.subr.bf16.mxu0 0
  %948 = vmatpush1.bf16.xpose.msra.mxu0 0
  %949 = vmatprep.subr.bf16.mxu0 0
  %950 = vmatpush1.bf16.xpose.msra.mxu0 0
  %951 = vmatprep.subr.bf16.mxu0 0
  %952 = vmatpush1.bf16.xpose.msra.mxu0 0
  %953 = vmatprep.subr.bf16.mxu0 0
  %954 = vmatpush1.bf16.xpose.msra.mxu0 0
  %955 = vmatprep.subr.bf16.mxu0 0
  %956 = vmatpush1.bf16.xpose.msra.mxu0 0
  %957 = vmatprep.subr.bf16.mxu0 0
  %958 = vmatpush1.bf16.xpose.msra.mxu0 0
  %959 = vmatprep.subr.bf16.mxu0 0
  %960 = vmatpush1.bf16.xpose.msra.mxu0 0
  %961 = vmatprep.subr.bf16.mxu0 0
  %962 = vmatpush1.bf16.xpose.msra.mxu0 0
  %963 = vmatprep.subr.bf16.mxu0 0
  %964 = vmatpush1.bf16.xpose.msra.mxu0 0
  %965 = vmatprep.subr.bf16.mxu0 0
  %966 = vmatpush1.bf16.xpose.msra.mxu0 0
  %967 = vmatprep.subr.bf16.mxu0 0
  %968 = vmatpush1.bf16.xpose.msra.mxu0 0
  %969 = vmatprep.subr.bf16.mxu0 0
  %970 = vmatpush1.bf16.xpose.msra.mxu0 0
  %971 = vmatprep.subr.bf16.mxu0 0
  %972 = vmatpush1.bf16.xpose.msra.mxu0 0
  %973 = vmatprep.subr.bf16.mxu0 0
  %974 = vmatpush1.bf16.xpose.msra.mxu0 0
  %975 = vmatprep.mubr.bf16.mxu0 0
  %976 = vmatmul.mubr.bf16.gmra.mrb[0].mxu0 %v935
  %v977 = vpop.f32.mrb[0].mxu0
  %v978 = vadd.f32 0.0, %v977
  %v979 = vpop.f32.mrb[0].mxu0
  %v980 = vpop.f32.mrb[0].mxu0
  %v981 = vadd.f32 0.0, %v980
  %v982 = vpop.f32.mrb[0].mxu0
  %983 = vdwg.mxu0
  %v984 = vmul.f32 %v978, 0.35355338
  %v985 = vmul.f32 %v981, 0.35355338
  %s986 = scalar_lea.vmem %s6, 16
  %v987 = vld [vmem:[%s986] sm:$0xf]
  %v988 = vld [vmem:[%s986 + $0x4] sm:$0xf]
  %v989 = vld [vmem:[%s986 + $0x8] sm:$0xf]
  %v990 = vld [vmem:[%s986 + $0xc] sm:$0xf]
  %v995 = vunpack.c.l.b16 %v987
  %v996 = vunpack.c.l.b16 %v988
  %v997 = vunpack.c.l.b16 %v989
  %v998 = vunpack.c.l.b16 %v990
  %v999 = vpack.c.b16 %v996, %v995
  %v1000 = vpack.c.b16 %v998, %v997
  %v1002 = vsel %vm132, %v999, 0
  %v1005 = vsel %vm132, %v1000, 0
  %1007 = vmatprep.subr.bf16.mxu0 0
  %1008 = vmatpush1.bf16.xpose.msra.mxu0 %v1002
  %1009 = vmatprep.subr.bf16.mxu0 0
  %1010 = vmatpush1.bf16.xpose.msra.mxu0 %v1005
  %1011 = vmatprep.subr.bf16.mxu0 0
  %1012 = vmatpush1.bf16.xpose.msra.mxu0 0
  %1013 = vmatprep.subr.bf16.mxu0 0
  %1014 = vmatpush1.bf16.xpose.msra.mxu0 0
  %1015 = vmatprep.subr.bf16.mxu0 0
  %1016 = vmatpush1.bf16.xpose.msra.mxu0 0
  %1017 = vmatprep.subr.bf16.mxu0 0
  %1018 = vmatpush1.bf16.xpose.msra.mxu0 0
  %1019 = vmatprep.subr.bf16.mxu0 0
  %1020 = vmatpush1.bf16.xpose.msra.mxu0 0
  %1021 = vmatprep.subr.bf16.mxu0 0
  %1022 = vmatpush1.bf16.xpose.msra.mxu0 0
  %1023 = vmatprep.subr.bf16.mxu0 0
  %1024 = vmatpush1.bf16.xpose.msra.mxu0 0
  %1025 = vmatprep.subr.bf16.mxu0 0
  %1026 = vmatpush1.bf16.xpose.msra.mxu0 0
  %1027 = vmatprep.subr.bf16.mxu0 0
  %1028 = vmatpush1.bf16.xpose.msra.mxu0 0
  %1029 = vmatprep.subr.bf16.mxu0 0
  %1030 = vmatpush1.bf16.xpose.msra.mxu0 0
  %1031 = vmatprep.subr.bf16.mxu0 0
  %1032 = vmatpush1.bf16.xpose.msra.mxu0 0
  %1033 = vmatprep.subr.bf16.mxu0 0
  %1034 = vmatpush1.bf16.xpose.msra.mxu0 0
  %1035 = vmatprep.subr.bf16.mxu0 0
  %1036 = vmatpush1.bf16.xpose.msra.mxu0 0
  %1037 = vmatprep.subr.bf16.mxu0 0
  %1038 = vmatpush1.bf16.xpose.msra.mxu0 0
  %1039 = vmatprep.mubr.bf16.mxu0 0
  %1040 = vmatmul.mubr.bf16.gmra.mrb[0].mxu0 %v935
  %v1041 = vpop.f32.mrb[0].mxu0
  %v1042 = vadd.f32 0.0, %v1041
  %v1043 = vpop.f32.mrb[0].mxu0
  %v1044 = vpop.f32.mrb[0].mxu0
  %v1045 = vadd.f32 0.0, %v1044
  %v1046 = vpop.f32.mrb[0].mxu0
  %1047 = vdwg.mxu0
  %s1048 = scalar_lea.vmem %s7, 16
  %v1049 = vld [vmem:[%s1048] sm:$0xf]
  %v1050 = vld [vmem:[%s1048 + $0x4] sm:$0xf]
  %v1051 = vld [vmem:[%s1048 + $0x8] sm:$0xf]
  %v1052 = vld [vmem:[%s1048 + $0xc] sm:$0xf]
  %v1057 = vunpack.c.l.b16 %v1049
  %v1058 = vunpack.c.l.b16 %v1050
  %v1059 = vunpack.c.l.b16 %v1051
  %v1060 = vunpack.c.l.b16 %v1052
  %v1061 = vpack.c.b16 %v1058, %v1057
  %v1062 = vpack.c.b16 %v1060, %v1059
  %v1064 = vsel %vm132, %v1061, 0
  %v1067 = vsel %vm132, %v1062, 0
  %1069 = vmatprep.subr.bf16.mxu0 0
  %1070 = vmatpush1.bf16.xpose.msra.mxu0 %v1064
  %1071 = vmatprep.subr.bf16.mxu0 0
  %1072 = vmatpush1.bf16.xpose.msra.mxu0 %v1067
  %1073 = vmatprep.subr.bf16.mxu0 0
  %1074 = vmatpush1.bf16.xpose.msra.mxu0 0
  %1075 = vmatprep.subr.bf16.mxu0 0
  %1076 = vmatpush1.bf16.xpose.msra.mxu0 0
  %1077 = vmatprep.subr.bf16.mxu0 0
  %1078 = vmatpush1.bf16.xpose.msra.mxu0 0
  %1079 = vmatprep.subr.bf16.mxu0 0
  %1080 = vmatpush1.bf16.xpose.msra.mxu0 0
  %1081 = vmatprep.subr.bf16.mxu0 0
  %1082 = vmatpush1.bf16.xpose.msra.mxu0 0
  %1083 = vmatprep.subr.bf16.mxu0 0
  %1084 = vmatpush1.bf16.xpose.msra.mxu0 0
  %1085 = vmatprep.subr.bf16.mxu0 0
  %1086 = vmatpush1.bf16.xpose.msra.mxu0 0
  %1087 = vmatprep.subr.bf16.mxu0 0
  %1088 = vmatpush1.bf16.xpose.msra.mxu0 0
  %1089 = vmatprep.subr.bf16.mxu0 0
  %1090 = vmatpush1.bf16.xpose.msra.mxu0 0
  %1091 = vmatprep.subr.bf16.mxu0 0
  %1092 = vmatpush1.bf16.xpose.msra.mxu0 0
  %1093 = vmatprep.subr.bf16.mxu0 0
  %1094 = vmatpush1.bf16.xpose.msra.mxu0 0
  %1095 = vmatprep.subr.bf16.mxu0 0
  %1096 = vmatpush1.bf16.xpose.msra.mxu0 0
  %1097 = vmatprep.subr.bf16.mxu0 0
  %1098 = vmatpush1.bf16.xpose.msra.mxu0 0
  %1099 = vmatprep.subr.bf16.mxu0 0
  %1100 = vmatpush1.bf16.xpose.msra.mxu0 0
  %1101 = vmatprep.mubr.bf16.mxu0 0
  %1102 = vmatmul.mubr.bf16.gmra.mrb[0].mxu0 %v935
  %v1103 = vpop.f32.mrb[0].mxu0
  %v1104 = vadd.f32 0.0, %v1103
  %v1105 = vpop.f32.mrb[0].mxu0
  %v1106 = vpop.f32.mrb[0].mxu0
  %v1107 = vadd.f32 0.0, %v1106
  %v1108 = vpop.f32.mrb[0].mxu0
  %1109 = vdwg.mxu0
  %v1112 = vrot.slane %v984, 4
  %v1113 = vrot.slane %v985, 4
  %v1114 = vsel %vm309, %v1112, %v1113
  %1115 = vrot.lane.b32.xlu0 %v1112, 120
  %v1116 = vpop.permute.xlu0 %1115
  %1117 = vrot.lane.b32.xlu0 %v1114, 120
  %v1118 = vpop.permute.xlu0 %1117
  %1121 = vrot.lane.b32.xlu0 %v984, 112
  %v1122 = vpop.permute.xlu0 %1121
  %1123 = vrot.lane.b32.xlu0 %v985, 112
  %v1124 = vpop.permute.xlu0 %1123
  %1127 = vrot.lane.b32.xlu0 %v1112, 104
  %v1128 = vpop.permute.xlu0 %1127
  %1129 = vrot.lane.b32.xlu0 %v1114, 104
  %v1130 = vpop.permute.xlu0 %1129
  %v1133 = vsel %vm309, %v985, %v1116
  %v1134 = vsel %vm309, %v1124, %v1128
  %v1137 = vrot.slane %v1042, 4
  %v1138 = vrot.slane %v1045, 4
  %v1139 = vsel %vm309, %v1137, %v1138
  %1140 = vrot.lane.b32.xlu0 %v1137, 120
  %v1141 = vpop.permute.xlu0 %1140
  %1142 = vrot.lane.b32.xlu0 %v1139, 120
  %v1143 = vpop.permute.xlu0 %1142
  %1146 = vrot.lane.b32.xlu0 %v1042, 112
  %v1147 = vpop.permute.xlu0 %1146
  %1148 = vrot.lane.b32.xlu0 %v1045, 112
  %v1149 = vpop.permute.xlu0 %1148
  %1152 = vrot.lane.b32.xlu0 %v1137, 104
  %v1153 = vpop.permute.xlu0 %1152
  %1154 = vrot.lane.b32.xlu0 %v1139, 104
  %v1155 = vpop.permute.xlu0 %1154
  %v1158 = vsel %vm309, %v1045, %v1141
  %v1159 = vsel %vm309, %v1149, %v1153
  %v1162 = vrot.slane %v1104, 4
  %v1163 = vrot.slane %v1107, 4
  %v1164 = vsel %vm309, %v1162, %v1163
  %1165 = vrot.lane.b32.xlu0 %v1162, 120
  %v1166 = vpop.permute.xlu0 %1165
  %1167 = vrot.lane.b32.xlu0 %v1164, 120
  %v1168 = vpop.permute.xlu0 %1167
  %1171 = vrot.lane.b32.xlu0 %v1104, 112
  %v1172 = vpop.permute.xlu0 %1171
  %1173 = vrot.lane.b32.xlu0 %v1107, 112
  %v1174 = vpop.permute.xlu0 %1173
  %1177 = vrot.lane.b32.xlu0 %v1162, 104
  %v1178 = vpop.permute.xlu0 %1177
  %1179 = vrot.lane.b32.xlu0 %v1164, 104
  %v1180 = vpop.permute.xlu0 %1179
  %v1183 = vsel %vm309, %v1107, %v1166
  %v1184 = vsel %vm309, %v1174, %v1178
  %v1185 = vpack.c.bf16 %v1133, %v984
  %v1186 = vpack.c.bf16 %v1122, %v1118
  %v1187 = vpack.c.bf16 %v1130, %v1134
  %v1188 = vpack.c.bf16 %v1158, %v1042
  %v1189 = vpack.c.bf16 %v1147, %v1143
  %v1190 = vpack.c.bf16 %v1155, %v1159
  %v1192 = vsel %vm389, %v1185, 0
  %v1195 = vsel %vm389, %v1186, 0
  %v1198 = vsel %vm389, %v1187, 0
  %v1201 = vsel %vm389, %v1188, 0
  %v1204 = vsel %vm389, %v1189, 0
  %v1207 = vsel %vm389, %v1190, 0
  %1209 = vmatprep.subr.bf16.mxu0 0
  %1210 = vmatpush1.bf16.xpose.msra.mxu0 %v1201
  %1211 = vmatprep.subr.bf16.mxu0 0
  %1212 = vmatpush1.bf16.xpose.msra.mxu0 %v1204
  %1213 = vmatprep.subr.bf16.mxu0 0
  %1214 = vmatpush1.bf16.xpose.msra.mxu0 %v1207
  %1215 = vmatprep.subr.bf16.mxu0 0
  %1216 = vmatpush1.bf16.xpose.msra.mxu0 0
  %1217 = vmatprep.subr.bf16.mxu0 0
  %1218 = vmatpush1.bf16.xpose.msra.mxu0 0
  %1219 = vmatprep.subr.bf16.mxu0 0
  %1220 = vmatpush1.bf16.xpose.msra.mxu0 0
  %1221 = vmatprep.subr.bf16.mxu0 0
  %1222 = vmatpush1.bf16.xpose.msra.mxu0 0
  %1223 = vmatprep.subr.bf16.mxu0 0
  %1224 = vmatpush1.bf16.xpose.msra.mxu0 0
  %1225 = vmatprep.subr.bf16.mxu0 0
  %1226 = vmatpush1.bf16.xpose.msra.mxu0 0
  %1227 = vmatprep.subr.bf16.mxu0 0
  %1228 = vmatpush1.bf16.xpose.msra.mxu0 0
  %1229 = vmatprep.subr.bf16.mxu0 0
  %1230 = vmatpush1.bf16.xpose.msra.mxu0 0
  %1231 = vmatprep.subr.bf16.mxu0 0
  %1232 = vmatpush1.bf16.xpose.msra.mxu0 0
  %1233 = vmatprep.subr.bf16.mxu0 0
  %1234 = vmatpush1.bf16.xpose.msra.mxu0 0
  %1235 = vmatprep.subr.bf16.mxu0 0
  %1236 = vmatpush1.bf16.xpose.msra.mxu0 0
  %1237 = vmatprep.subr.bf16.mxu0 0
  %1238 = vmatpush1.bf16.xpose.msra.mxu0 0
  %1239 = vmatprep.subr.bf16.mxu0 0
  %1240 = vmatpush1.bf16.xpose.msra.mxu0 0
  %1241 = vmatprep.mubr.bf16.mxu0 0
  %1242 = vmatmul.mubr.bf16.gmra.mrb[0].mxu0 %v1192
  %v1243 = vpop.f32.mrb[0].mxu0
  %v1244 = vadd.f32 %v84, %v1243
  %v1245 = vpop.f32.mrb[0].mxu0
  %v1246 = vpop.f32.mrb[0].mxu0
  %v1247 = vadd.f32 %v85, %v1246
  %v1248 = vpop.f32.mrb[0].mxu0
  %1249 = vmatprep.mubr.bf16.mxu0 0
  %1250 = vmatmul.mubr.bf16.gmra.mrb[0].mxu0 %v1195
  %v1251 = vpop.f32.mrb[0].mxu0
  %v1252 = vadd.f32 %v86, %v1251
  %v1253 = vpop.f32.mrb[0].mxu0
  %v1254 = vpop.f32.mrb[0].mxu0
  %v1255 = vadd.f32 %v87, %v1254
  %v1256 = vpop.f32.mrb[0].mxu0
  %1257 = vmatprep.mubr.bf16.mxu0 0
  %1258 = vmatmul.mubr.bf16.gmra.mrb[0].mxu0 %v1198
  %v1259 = vpop.f32.mrb[0].mxu0
  %v1260 = vadd.f32 %v88, %v1259
  %v1261 = vpop.f32.mrb[0].mxu0
  %v1262 = vpop.f32.mrb[0].mxu0
  %v1263 = vadd.f32 %v89, %v1262
  %v1264 = vpop.f32.mrb[0].mxu0
  %1265 = vdwg.mxu0
  %v1266 = vsel %vm465, %v1244, -inf
  %1267 = vmax.xlane.f32.xlu0 %v1266
  %v1268 = vpop.xlane.xlu0 %1267
  %v1269 = vsel %vm465, %v1247, -inf
  %1270 = vmax.xlane.f32.xlu0 %v1269
  %v1271 = vpop.xlane.xlu0 %1270
  %v1272 = vsel %vm465, %v1252, -inf
  %1273 = vmax.xlane.f32.xlu0 %v1272
  %v1274 = vpop.xlane.xlu0 %1273
  %v1275 = vsel %vm465, %v1255, -inf
  %1276 = vmax.xlane.f32.xlu0 %v1275
  %v1277 = vpop.xlane.xlu0 %1276
  %v1278 = vsel %vm465, %v1260, -inf
  %1279 = vmax.xlane.f32.xlu0 %v1278
  %v1280 = vpop.xlane.xlu0 %1279
  %v1281 = vsel %vm465, %v1263, -inf
  %1282 = vmax.xlane.f32.xlu0 %v1281
  %v1283 = vpop.xlane.xlu0 %1282
  %v1284 = vsub.f32 %v1244, %v1268
  %v1285 = vsub.f32 %v1247, %v1271
  %v1286 = vsub.f32 %v1252, %v1274
  %v1287 = vsub.f32 %v1255, %v1277
  %v1288 = vsub.f32 %v1260, %v1280
  %v1289 = vsub.f32 %v1263, %v1283
  %v1290 = vmul.f32 %v1284, 1.442695
  %v1291 = vpow.pop %v1290
  %v1292 = vmul.f32 %v1285, 1.442695
  %v1293 = vpow.pop %v1292
  %v1294 = vmul.f32 %v1286, 1.442695
  %v1295 = vpow.pop %v1294
  %v1296 = vmul.f32 %v1287, 1.442695
  %v1297 = vpow.pop %v1296
  %v1298 = vmul.f32 %v1288, 1.442695
  %v1299 = vpow.pop %v1298
  %v1300 = vmul.f32 %v1289, 1.442695
  %v1301 = vpow.pop %v1300
  %v1302 = vsel %vm465, %v1291, 0.0
  %1303 = vadd.xlane.f32.xlu0 %v1302
  %v1304 = vpop.xlane.xlu0 %1303
  %v1305 = vsel %vm465, %v1293, 0.0
  %1306 = vadd.xlane.f32.xlu0 %v1305
  %v1307 = vpop.xlane.xlu0 %1306
  %v1308 = vsel %vm465, %v1295, 0.0
  %1309 = vadd.xlane.f32.xlu0 %v1308
  %v1310 = vpop.xlane.xlu0 %1309
  %v1311 = vsel %vm465, %v1297, 0.0
  %1312 = vadd.xlane.f32.xlu0 %v1311
  %v1313 = vpop.xlane.xlu0 %1312
  %v1314 = vsel %vm465, %v1299, 0.0
  %1315 = vadd.xlane.f32.xlu0 %v1314
  %v1316 = vpop.xlane.xlu0 %1315
  %v1317 = vsel %vm465, %v1301, 0.0
  %1318 = vadd.xlane.f32.xlu0 %v1317
  %v1319 = vpop.xlane.xlu0 %1318
  %v1320 = vrcp.pop %v1304
  %v1321 = vrcp.pop %v1307
  %v1322 = vrcp.pop %v1310
  %v1323 = vrcp.pop %v1313
  %v1324 = vrcp.pop %v1316
  %v1325 = vrcp.pop %v1319
  %v1326 = vmul.f32 %v1291, %v1320
  %v1327 = vmul.f32 %v1293, %v1321
  %v1328 = vmul.f32 %v1295, %v1322
  %v1329 = vmul.f32 %v1297, %v1323
  %v1330 = vmul.f32 %v1299, %v1324
  %v1331 = vmul.f32 %v1301, %v1325
  %v1332 = vpack.c.bf16 %v1327, %v1326
  %v1333 = vpack.c.bf16 %v1329, %v1328
  %v1334 = vpack.c.bf16 %v1331, %v1330
  %v1335 = vpack.c.bf16 %v1183, %v1104
  %v1336 = vpack.c.bf16 %v1172, %v1168
  %v1337 = vpack.c.bf16 %v1180, %v1184
  %v1339 = vsel %vm465, %v1332, 0
  %v1342 = vsel %vm465, %v1333, 0
  %v1345 = vsel %vm465, %v1334, 0
  %1347 = vmatprep.subr.bf16.mxu0 0
  %1348 = vmatpush1.bf16.msra.mxu0 %v1335
  %1349 = vmatprep.subr.bf16.mxu0 0
  %1350 = vmatpush1.bf16.msra.mxu0 %v1336
  %1351 = vmatprep.subr.bf16.mxu0 0
  %1352 = vmatpush1.bf16.msra.mxu0 %v1337
  %1353 = vmatprep.subr.bf16.mxu0 0
  %1354 = vmatpush1.bf16.msra.mxu0 0
  %1355 = vmatprep.subr.bf16.mxu0 0
  %1356 = vmatpush1.bf16.msra.mxu0 0
  %1357 = vmatprep.subr.bf16.mxu0 0
  %1358 = vmatpush1.bf16.msra.mxu0 0
  %1359 = vmatprep.subr.bf16.mxu0 0
  %1360 = vmatpush1.bf16.msra.mxu0 0
  %1361 = vmatprep.subr.bf16.mxu0 0
  %1362 = vmatpush1.bf16.msra.mxu0 0
  %1363 = vmatprep.subr.bf16.mxu0 0
  %1364 = vmatpush1.bf16.msra.mxu0 0
  %1365 = vmatprep.subr.bf16.mxu0 0
  %1366 = vmatpush1.bf16.msra.mxu0 0
  %1367 = vmatprep.subr.bf16.mxu0 0
  %1368 = vmatpush1.bf16.msra.mxu0 0
  %1369 = vmatprep.subr.bf16.mxu0 0
  %1370 = vmatpush1.bf16.msra.mxu0 0
  %1371 = vmatprep.subr.bf16.mxu0 0
  %1372 = vmatpush1.bf16.msra.mxu0 0
  %1373 = vmatprep.subr.bf16.mxu0 0
  %1374 = vmatpush1.bf16.msra.mxu0 0
  %1375 = vmatprep.subr.bf16.mxu0 0
  %1376 = vmatpush1.bf16.msra.mxu0 0
  %1377 = vmatprep.subr.bf16.mxu0 0
  %1378 = vmatpush1.bf16.msra.mxu0 0
  %1379 = vmatprep.mubr.bf16.mxu0 0
  %1380 = vmatmul.mubr.bf16.gmra.mrb[0].mxu0 %v1339
  %v1381 = vpop.f32.mrb[0].mxu0
  %v1382 = vadd.f32 0.0, %v1381
  %v1383 = vpop.f32.mrb[0].mxu0
  %v1384 = vpop.f32.mrb[0].mxu0
  %v1385 = vadd.f32 0.0, %v1384
  %v1386 = vpop.f32.mrb[0].mxu0
  %1387 = vmatprep.mubr.bf16.mxu0 0
  %1388 = vmatmul.mubr.bf16.gmra.mrb[0].mxu0 %v1342
  %v1389 = vpop.f32.mrb[0].mxu0
  %v1390 = vadd.f32 0.0, %v1389
  %v1391 = vpop.f32.mrb[0].mxu0
  %v1392 = vpop.f32.mrb[0].mxu0
  %v1393 = vadd.f32 0.0, %v1392
  %v1394 = vpop.f32.mrb[0].mxu0
  %1395 = vmatprep.mubr.bf16.mxu0 0
  %1396 = vmatmul.mubr.bf16.gmra.mrb[0].mxu0 %v1345
  %v1397 = vpop.f32.mrb[0].mxu0
  %v1398 = vadd.f32 0.0, %v1397
  %v1399 = vpop.f32.mrb[0].mxu0
  %v1400 = vpop.f32.mrb[0].mxu0
  %v1401 = vadd.f32 0.0, %v1400
  %v1402 = vpop.f32.mrb[0].mxu0
  %1403 = vdwg.mxu0
  %v1406 = vrot.slane %v1385, 4
  %v1407 = vrot.slane %v1390, 4
  %v1408 = vsel %vm309, %v1406, %v1407
  %1409 = vrot.lane.b32.xlu0 %v1408, 8
  %v1410 = vpop.permute.xlu0 %1409
  %1411 = vrot.lane.b32.xlu0 %v1407, 8
  %v1412 = vpop.permute.xlu0 %1411
  %1417 = vrot.lane.b32.xlu0 %v1393, 16
  %v1418 = vpop.permute.xlu0 %1417
  %1419 = vrot.lane.b32.xlu0 %v1398, 16
  %v1420 = vpop.permute.xlu0 %1419
  %v1424 = vrot.slane %v1398, 4
  %v1425 = vrot.slane %v1401, 4
  %v1426 = vsel %vm309, %v1424, %v1425
  %1427 = vrot.lane.b32.xlu0 %v1426, 24
  %v1428 = vpop.permute.xlu0 %1427
  %1429 = vrot.lane.b32.xlu0 %v1425, 24
  %v1430 = vpop.permute.xlu0 %1429
  %v1433 = vsel %vm389, %v1382, %v1410
  %v1434 = vsel %vm389, %v1385, %v1412
  %v1435 = vsel %vm635, %v1433, %v1418
  %v1436 = vsel %vm635, %v1434, %v1420
  %v1437 = vsel %vm638, %v1435, %v1428
  %v1438 = vsel %vm638, %v1436, %v1430
  %s1439 = scalar_lea.vmem %s8, 1
  %v1440 = vld [vmem:[%s1439] sm:$0x1]
  %s1441 = scalar_lea.vmem %s9, 1
  %v1442 = vld [vmem:[%s1441] sm:$0x1]
  %v1443 = vsel %vm132, %v1437, 0.0
  %1444 = vadd.xlane.f32.xlu0 %v1443
  %v1445 = vpop.xlane.xlu0 %1444
  %v1446 = vsel %vm646, %v1438, 0.0
  %1447 = vadd.xlane.f32.xlu0 %v1446
  %v1448 = vpop.xlane.xlu0 %1447
  %v1449 = vmul.f32 %v1445, %v650
  %v1450 = vmul.f32 %v1448, %v650
  %v1451 = vsub.f32 %v1437, %v1449
  %v1452 = vsub.f32 %v1438, %v1450
  %v1453 = vmul.f32 %v1451, %v1451
  %v1454 = vmul.f32 %v1452, %v1452
  %v1455 = vsel %vm132, %v1453, 0.0
  %1456 = vadd.xlane.f32.xlu0 %v1455
  %v1457 = vpop.xlane.xlu0 %1456
  %v1458 = vsel %vm646, %v1454, 0.0
  %1459 = vadd.xlane.f32.xlu0 %v1458
  %v1460 = vpop.xlane.xlu0 %1459
  %v1461 = vmul.f32 %v1457, %v650
  %v1462 = vmul.f32 %v1460, %v650
  %v1463 = vadd.f32 %v1461, 1e-05
  %v1464 = vadd.f32 %v1462, 1e-05
  %v1465 = vrsqrt.pop %v1463
  %v1466 = vrsqrt.pop %v1464
  %v1467 = vmul.f32 %v1451, %v1465
  %v1468 = vmul.f32 %v1452, %v1466
  %v1470 = vlaneseq
  %v1471 = vshrl.u32 %v1470, 7
  %v1472 = vsub.s32 0, %v1471
  %v1473 = vrot.slane %v1440, %v1472
  %v1475 = vmul.f32 %v1467, %v1473
  %v1476 = vmul.f32 %v1468, %v1473
  %v1478 = vlaneseq
  %v1479 = vshrl.u32 %v1478, 7
  %v1480 = vsub.s32 0, %v1479
  %v1481 = vrot.slane %v1442, %v1480
  %v1483 = vadd.f32 %v1475, %v1481
  %v1484 = vadd.f32 %v1476, %v1481
  %s1485 = scalar_lea.vmem %s10, 64
  %v1486 = vld [vmem:[%s1485] sm:$0xf]
  %v1487 = vld [vmem:[%s1485 + $0x4] sm:$0xf]
  %v1488 = vld [vmem:[%s1485 + $0x8] sm:$0xf]
  %v1489 = vld [vmem:[%s1485 + $0xc] sm:$0xf]
  %v1490 = vld [vmem:[%s1485 + $0x10] sm:$0xf]
  %v1491 = vld [vmem:[%s1485 + $0x14] sm:$0xf]
  %v1492 = vld [vmem:[%s1485 + $0x18] sm:$0xf]
  %v1493 = vld [vmem:[%s1485 + $0x1c] sm:$0xf]
  %v1494 = vld [vmem:[%s1485 + $0x20] sm:$0xf]
  %v1495 = vld [vmem:[%s1485 + $0x24] sm:$0xf]
  %v1496 = vld [vmem:[%s1485 + $0x28] sm:$0xf]
  %v1497 = vld [vmem:[%s1485 + $0x2c] sm:$0xf]
  %v1498 = vld [vmem:[%s1485 + $0x30] sm:$0xf]
  %v1499 = vld [vmem:[%s1485 + $0x34] sm:$0xf]
  %v1500 = vld [vmem:[%s1485 + $0x38] sm:$0xf]
  %v1501 = vld [vmem:[%s1485 + $0x3c] sm:$0xf]
  %v1502 = vpack.c.bf16 %v1484, %v1483
  %v1519 = vunpack.c.l.b16 %v1486
  %v1520 = vunpack.c.l.b16 %v1487
  %v1521 = vunpack.c.l.b16 %v1488
  %v1522 = vunpack.c.l.b16 %v1489
  %v1523 = vunpack.c.l.b16 %v1490
  %v1524 = vunpack.c.l.b16 %v1491
  %v1525 = vunpack.c.l.b16 %v1492
  %v1526 = vunpack.c.l.b16 %v1493
  %v1527 = vunpack.c.l.b16 %v1494
  %v1528 = vunpack.c.l.b16 %v1495
  %v1529 = vunpack.c.l.b16 %v1496
  %v1530 = vunpack.c.l.b16 %v1497
  %v1531 = vunpack.c.l.b16 %v1498
  %v1532 = vunpack.c.l.b16 %v1499
  %v1533 = vunpack.c.l.b16 %v1500
  %v1534 = vunpack.c.l.b16 %v1501
  %v1535 = vpack.c.b16 %v1520, %v1519
  %v1536 = vpack.c.b16 %v1522, %v1521
  %v1537 = vpack.c.b16 %v1524, %v1523
  %v1538 = vpack.c.b16 %v1526, %v1525
  %v1539 = vpack.c.b16 %v1528, %v1527
  %v1540 = vpack.c.b16 %v1530, %v1529
  %v1541 = vpack.c.b16 %v1532, %v1531
  %v1542 = vpack.c.b16 %v1534, %v1533
  %v1544 = vsel %vm132, %v1502, 0
  %v1547 = vsel %vm132, %v1535, 0
  %v1550 = vsel %vm132, %v1536, 0
  %v1553 = vsel %vm132, %v1537, 0
  %v1556 = vsel %vm132, %v1538, 0
  %v1559 = vsel %vm132, %v1539, 0
  %v1562 = vsel %vm132, %v1540, 0
  %v1565 = vsel %vm132, %v1541, 0
  %v1568 = vsel %vm132, %v1542, 0
  %1570 = vmatprep.subr.bf16.mxu0 0
  %1571 = vmatpush1.bf16.xpose.msra.mxu0 %v1547
  %1572 = vmatprep.subr.bf16.mxu0 0
  %1573 = vmatpush1.bf16.xpose.msra.mxu0 %v1550
  %1574 = vmatprep.subr.bf16.mxu0 0
  %1575 = vmatpush1.bf16.xpose.msra.mxu0 %v1553
  %1576 = vmatprep.subr.bf16.mxu0 0
  %1577 = vmatpush1.bf16.xpose.msra.mxu0 %v1556
  %1578 = vmatprep.subr.bf16.mxu0 0
  %1579 = vmatpush1.bf16.xpose.msra.mxu0 %v1559
  %1580 = vmatprep.subr.bf16.mxu0 0
  %1581 = vmatpush1.bf16.xpose.msra.mxu0 %v1562
  %1582 = vmatprep.subr.bf16.mxu0 0
  %1583 = vmatpush1.bf16.xpose.msra.mxu0 %v1565
  %1584 = vmatprep.subr.bf16.mxu0 0
  %1585 = vmatpush1.bf16.xpose.msra.mxu0 %v1568
  %1586 = vmatprep.subr.bf16.mxu0 0
  %1587 = vmatpush1.bf16.xpose.msra.mxu0 0
  %1588 = vmatprep.subr.bf16.mxu0 0
  %1589 = vmatpush1.bf16.xpose.msra.mxu0 0
  %1590 = vmatprep.subr.bf16.mxu0 0
  %1591 = vmatpush1.bf16.xpose.msra.mxu0 0
  %1592 = vmatprep.subr.bf16.mxu0 0
  %1593 = vmatpush1.bf16.xpose.msra.mxu0 0
  %1594 = vmatprep.subr.bf16.mxu0 0
  %1595 = vmatpush1.bf16.xpose.msra.mxu0 0
  %1596 = vmatprep.subr.bf16.mxu0 0
  %1597 = vmatpush1.bf16.xpose.msra.mxu0 0
  %1598 = vmatprep.subr.bf16.mxu0 0
  %1599 = vmatpush1.bf16.xpose.msra.mxu0 0
  %1600 = vmatprep.subr.bf16.mxu0 0
  %1601 = vmatpush1.bf16.xpose.msra.mxu0 0
  %1602 = vmatprep.mubr.bf16.mxu0 0
  %1603 = vmatmul.mubr.bf16.gmra.mrb[0].mxu0 %v1544
  %v1604 = vpop.f32.mrb[0].mxu0
  %v1605 = vadd.f32 0.0, %v1604
  %v1606 = vpop.f32.mrb[0].mxu0
  %v1607 = vpop.f32.mrb[0].mxu0
  %v1608 = vadd.f32 0.0, %v1607
  %v1609 = vpop.f32.mrb[0].mxu0
  %1610 = vdwg.mxu0
  %v1611 = vmax.f32 %v1605, 0.0
  %v1612 = vmax.f32 %v1608, 0.0
  %s1613 = scalar_lea.vmem %s11, 16
  %v1614 = vld [vmem:[%s1613] sm:$0xf]
  %v1615 = vld [vmem:[%s1613 + $0x4] sm:$0xf]
  %v1616 = vld [vmem:[%s1613 + $0x8] sm:$0xf]
  %v1617 = vld [vmem:[%s1613 + $0xc] sm:$0xf]
  %v1618 = vpack.c.bf16 %v1612, %v1611
  %v1623 = vunpack.c.l.b16 %v1614
  %v1624 = vunpack.c.l.b16 %v1615
  %v1625 = vunpack.c.l.b16 %v1616
  %v1626 = vunpack.c.l.b16 %v1617
  %v1627 = vpack.c.b16 %v1624, %v1623
  %v1628 = vpack.c.b16 %v1626, %v1625
  %1631 = vmatprep.subr.bf16.mxu0 0
  %1632 = vmatpush1.bf16.xpose.msra.mxu0 %v1627
  %1633 = vmatprep.subr.bf16.mxu0 0
  %1634 = vmatpush1.bf16.xpose.msra.mxu0 %v1628
  %1635 = vmatprep.subr.bf16.mxu0 0
  %1636 = vmatpush1.bf16.xpose.msra.mxu0 0
  %1637 = vmatprep.subr.bf16.mxu0 0
  %1638 = vmatpush1.bf16.xpose.msra.mxu0 0
  %1639 = vmatprep.subr.bf16.mxu0 0
  %1640 = vmatpush1.bf16.xpose.msra.mxu0 0
  %1641 = vmatprep.subr.bf16.mxu0 0
  %1642 = vmatpush1.bf16.xpose.msra.mxu0 0
  %1643 = vmatprep.subr.bf16.mxu0 0
  %1644 = vmatpush1.bf16.xpose.msra.mxu0 0
  %1645 = vmatprep.subr.bf16.mxu0 0
  %1646 = vmatpush1.bf16.xpose.msra.mxu0 0
  %1647 = vmatprep.subr.bf16.mxu0 0
  %1648 = vmatpush1.bf16.xpose.msra.mxu0 0
  %1649 = vmatprep.subr.bf16.mxu0 0
  %1650 = vmatpush1.bf16.xpose.msra.mxu0 0
  %1651 = vmatprep.subr.bf16.mxu0 0
  %1652 = vmatpush1.bf16.xpose.msra.mxu0 0
  %1653 = vmatprep.subr.bf16.mxu0 0
  %1654 = vmatpush1.bf16.xpose.msra.mxu0 0
  %1655 = vmatprep.subr.bf16.mxu0 0
  %1656 = vmatpush1.bf16.xpose.msra.mxu0 0
  %1657 = vmatprep.subr.bf16.mxu0 0
  %1658 = vmatpush1.bf16.xpose.msra.mxu0 0
  %1659 = vmatprep.subr.bf16.mxu0 0
  %1660 = vmatpush1.bf16.xpose.msra.mxu0 0
  %1661 = vmatprep.subr.bf16.mxu0 0
  %1662 = vmatpush1.bf16.xpose.msra.mxu0 0
  %1663 = vmatprep.mubr.bf16.mxu0 0
  %1664 = vmatmul.mubr.bf16.gmra.mrb[0].mxu0 %v1618
  %v1665 = vpop.f32.mrb[0].mxu0
  %v1666 = vadd.f32 %v916, %v1665
  %v1667 = vpop.f32.mrb[0].mxu0
  %v1668 = vpop.f32.mrb[0].mxu0
  %v1669 = vadd.f32 %v917, %v1668
  %v1670 = vpop.f32.mrb[0].mxu0
  %1671 = vdwg.mxu0
  %v1672 = vld [vmem:[%s12] sm:$0xf]
  %v1673 = vld [vmem:[%s12 + $0x4] sm:$0xf]
  %v1674 = vld [vmem:[%s12 + $0x8] sm:$0xf]
  %v1675 = vld [vmem:[%s12 + $0xc] sm:$0xf]
  %v1676 = vld [vmem:[%s12 + $0x10] sm:$0xf]
  %v1677 = vld [vmem:[%s12 + $0x14] sm:$0xf]
  %v1678 = vld [vmem:[%s12 + $0x18] sm:$0xf]
  %v1679 = vld [vmem:[%s12 + $0x1c] sm:$0xf]
  %v1680 = vld [vmem:[%s12 + $0x20] sm:$0xf]
  %v1681 = vld [vmem:[%s12 + $0x24] sm:$0xf]
  %v1682 = vld [vmem:[%s12 + $0x28] sm:$0xf]
  %v1683 = vld [vmem:[%s12 + $0x2c] sm:$0xf]
  %v1684 = vld [vmem:[%s12 + $0x30] sm:$0xf]
  %v1685 = vld [vmem:[%s12 + $0x34] sm:$0xf]
  %v1686 = vld [vmem:[%s12 + $0x38] sm:$0xf]
  %v1687 = vld [vmem:[%s12 + $0x3c] sm:$0xf]
  %v1688 = vpack.c.bf16 %v1669, %v1666
  %v1705 = vunpack.c.l.b16 %v1672
  %v1706 = vunpack.c.l.b16 %v1673
  %v1707 = vunpack.c.l.b16 %v1674
  %v1708 = vunpack.c.l.b16 %v1675
  %v1709 = vunpack.c.l.b16 %v1676
  %v1710 = vunpack.c.l.b16 %v1677
  %v1711 = vunpack.c.l.b16 %v1678
  %v1712 = vunpack.c.l.b16 %v1679
  %v1713 = vunpack.c.l.b16 %v1680
  %v1714 = vunpack.c.l.b16 %v1681
  %v1715 = vunpack.c.l.b16 %v1682
  %v1716 = vunpack.c.l.b16 %v1683
  %v1717 = vunpack.c.l.b16 %v1684
  %v1718 = vunpack.c.l.b16 %v1685
  %v1719 = vunpack.c.l.b16 %v1686
  %v1720 = vunpack.c.l.b16 %v1687
  %v1721 = vpack.c.b16 %v1706, %v1705
  %v1722 = vpack.c.b16 %v1708, %v1707
  %v1723 = vpack.c.b16 %v1710, %v1709
  %v1724 = vpack.c.b16 %v1712, %v1711
  %v1725 = vpack.c.b16 %v1714, %v1713
  %v1726 = vpack.c.b16 %v1716, %v1715
  %v1727 = vpack.c.b16 %v1718, %v1717
  %v1728 = vpack.c.b16 %v1720, %v1719
  %v1730 = vsel %vm132, %v1688, 0
  %v1733 = vsel %vm132, %v1721, 0
  %v1736 = vsel %vm132, %v1722, 0
  %v1739 = vsel %vm132, %v1723, 0
  %v1742 = vsel %vm132, %v1724, 0
  %v1745 = vsel %vm132, %v1725, 0
  %v1748 = vsel %vm132, %v1726, 0
  %v1751 = vsel %vm132, %v1727, 0
  %v1754 = vsel %vm132, %v1728, 0
  %1756 = vmatprep.subr.bf16.mxu0 0
  %1757 = vmatpush1.bf16.xpose.msra.mxu0 %v1733
  %1758 = vmatprep.subr.bf16.mxu0 0
  %1759 = vmatpush1.bf16.xpose.msra.mxu0 %v1736
  %1760 = vmatprep.subr.bf16.mxu0 0
  %1761 = vmatpush1.bf16.xpose.msra.mxu0 %v1739
  %1762 = vmatprep.subr.bf16.mxu0 0
  %1763 = vmatpush1.bf16.xpose.msra.mxu0 %v1742
  %1764 = vmatprep.subr.bf16.mxu0 0
  %1765 = vmatpush1.bf16.xpose.msra.mxu0 %v1745
  %1766 = vmatprep.subr.bf16.mxu0 0
  %1767 = vmatpush1.bf16.xpose.msra.mxu0 %v1748
  %1768 = vmatprep.subr.bf16.mxu0 0
  %1769 = vmatpush1.bf16.xpose.msra.mxu0 %v1751
  %1770 = vmatprep.subr.bf16.mxu0 0
  %1771 = vmatpush1.bf16.xpose.msra.mxu0 %v1754
  %1772 = vmatprep.subr.bf16.mxu0 0
  %1773 = vmatpush1.bf16.xpose.msra.mxu0 0
  %1774 = vmatprep.subr.bf16.mxu0 0
  %1775 = vmatpush1.bf16.xpose.msra.mxu0 0
  %1776 = vmatprep.subr.bf16.mxu0 0
  %1777 = vmatpush1.bf16.xpose.msra.mxu0 0
  %1778 = vmatprep.subr.bf16.mxu0 0
  %1779 = vmatpush1.bf16.xpose.msra.mxu0 0
  %1780 = vmatprep.subr.bf16.mxu0 0
  %1781 = vmatpush1.bf16.xpose.msra.mxu0 0
  %1782 = vmatprep.subr.bf16.mxu0 0
  %1783 = vmatpush1.bf16.xpose.msra.mxu0 0
  %1784 = vmatprep.subr.bf16.mxu0 0
  %1785 = vmatpush1.bf16.xpose.msra.mxu0 0
  %1786 = vmatprep.subr.bf16.mxu0 0
  %1787 = vmatpush1.bf16.xpose.msra.mxu0 0
  %1788 = vmatprep.mubr.bf16.mxu0 0
  %1789 = vmatmul.mubr.bf16.gmra.mrb[0].mxu0 %v1730
  %v1790 = vpop.f32.mrb[0].mxu0
  %v1791 = vadd.f32 0.0, %v1790
  %v1792 = vpop.f32.mrb[0].mxu0
  %v1793 = vpop.f32.mrb[0].mxu0
  %v1794 = vadd.f32 0.0, %v1793
  %v1795 = vpop.f32.mrb[0].mxu0
  %1796 = vdwg.mxu0
  %1797 = vst [vmem:[%s13] sm:$0xff] %v1791
  %1798 = vst [vmem:[%s13 + $0x8] sm:$0xf] %v1794
  // Predicated region
  $region54: #{transformer_forward.1} parent=0 // pred_check
    _
  $region55: #{transformer_forward.1} parent=0 // pred_check_branch
    %1800 = sbr.rel (0) target = $region57
  $region56: #{transformer_forward.1} parent=0 // pred_region
    _
  $region57: #{transformer_forward.1} parent=0 // pred_fallthru
    _
  // Predicated region
  $region58: #{transformer_forward.1} parent=0 // pred_check
    _
  $region59: #{transformer_forward.1} parent=0 // pred_check_branch
    %1802 = sbr.rel (0) target = $region61
  $region60: #{transformer_forward.1} parent=0 // pred_region
    _
  $region61: #{transformer_forward.1} parent=0 // pred_fallthru
    _

</llo_original>
